<compile_context>
chip_gen: v6e
topology: v6e:2x2x1
jax: 0.10.0
libtpu: 0.0.40
codegen_flags: <defaults>
</compile_context>

<pallas_src>
import functools

import jax
import jax.numpy as jnp
from jax import lax
from jax.experimental import pallas as pl
from jax.experimental.pallas import tpu as pltpu


def _lstm2_kernel(x_ref, w_ref, b_ref, o_ref, h1, c1, h2, c2, *,
                  hidden, tb, unroll):
    """One grid step: advance both (fused) LSTM passes over `tb` timesteps.

    x_ref : (tb, bb, D)    bf16   time-major input block
    w_ref : (D+H, 4H)      bf16   stacked [W_ih^T ; W_hh^T]   (resident)
    b_ref : (1, 4H)        f32    combined bias b_ih + b_hh    (resident)
    o_ref : (tb, bb, H)    f32    output block (h2 per step)
    h1,c1,h2,c2 : (bb, H)  f32    recurrent state scratch (persists over time blocks)
    """
    H = hidden
    bb = h1.shape[0]

    # Reset recurrent state at the first time block of every batch block.
    @pl.when(pl.program_id(1) == 0)
    def _init():
        z = jnp.zeros((bb, H), jnp.float32)
        h1[...] = z
        c1[...] = z
        h2[...] = z
        c2[...] = z

    # --- hoisted out of the time loop -------------------------------------
    w = w_ref[...]                                            # (D+H, 4H) bf16
    bias = jnp.broadcast_to(b_ref[...], (bb, 4 * H))          # (bb, 4H) f32
    lane = lax.broadcasted_iota(jnp.int32, (bb, 4 * H), 1)
    g_mask = (lane >= 2 * H) & (lane < 3 * H)                 # tanh lanes (g gate)

    def cell(xin_bf16, h, c):
        """One LSTM cell step with the fused [x,h] @ [Wih;Whh] matmul."""
        xh = jnp.concatenate([xin_bf16, h.astype(jnp.bfloat16)], axis=-1)
        gates = jnp.dot(xh, w, preferred_element_type=jnp.float32) + bias
        # Full-width activations + lane-mask select (PyTorch gate order i,f,g,o).
        act = jnp.where(g_mask, jnp.tanh(gates), jax.nn.sigmoid(gates))
        i = act[:, 0 * H:1 * H]
        f = act[:, 1 * H:2 * H]
        g = act[:, 2 * H:3 * H]
        o = act[:, 3 * H:4 * H]
        c_new = f * c + i * g
        h_new = o * jnp.tanh(c_new)
        return h_new, c_new

    def step(tt, carry):
        a1, s1, a2, s2 = carry
        x_t = x_ref[tt]                                       # (bb, D) bf16
        # First LSTM pass on x_t.
        a1, s1 = cell(x_t, a1, s1)
        # tanh + second LSTM pass (same weights).
        a2, s2 = cell(jnp.tanh(a1).astype(jnp.bfloat16), a2, s2)
        o_ref[tt] = a2
        return a1, s1, a2, s2

    carry = (h1[...], c1[...], h2[...], c2[...])
    a1, s1, a2, s2 = lax.fori_loop(0, tb, step, carry, unroll=unroll)
    h1[...] = a1
    c1[...] = s1
    h2[...] = a2
    c2[...] = s2


def lstm_embedding_forward(x, w_ih, w_hh, b_ih, b_hh, *,
                           time_block=None, batch_block=None):
    """x: (B, T, D) batch_first.  Weights in PyTorch layout:
       w_ih:(4H, D), w_hh:(4H, H), b_ih/b_hh:(4H,).  Requires D == H
       (the second LSTM pass reuses the same weights)."""
    B, T, D = x.shape
    H = w_hh.shape[1]
    assert D == H, "second LSTM pass reuses the same weights -> input_size must equal num_units"

    # Time blocking: one grid step per `tb` timesteps (pad T up if needed).
    tb = int(time_block) if time_block is not None else min(T, 64)
    nt = -(-T // tb)
    T_pad = nt * tb

    # Batch blocking: "parallel" grid axis (v7x runs blocks on both TCs).
    bb = int(batch_block) if batch_block is not None else B
    assert B % bb == 0, "batch_block must divide batch"
    nb = B // bb

    # Stacked, pre-transposed bf16 weights and combined f32 bias.
    w_cat = jnp.concatenate([w_ih.T, w_hh.T], axis=0).astype(jnp.bfloat16)  # (D+H, 4H)
    bias = (b_ih + b_hh).reshape(1, 4 * H).astype(jnp.float32)              # (1, 4H)

    # Layout: (B, T, D) -> (nb, T_pad, bb, D), bf16, time-major inside a block.
    x_p = x.astype(jnp.bfloat16)
    if T_pad != T:
        x_p = jnp.pad(x_p, ((0, 0), (0, T_pad - T), (0, 0)))
    x_k = x_p.reshape(nb, bb, T_pad, D).transpose(0, 2, 1, 3)               # (nb, T_pad, bb, D)

    kernel = functools.partial(_lstm2_kernel, hidden=H, tb=tb, unroll=(tb <= 16))

    out_k = pl.pallas_call(
        kernel,
        out_shape=jax.ShapeDtypeStruct((nb, T_pad, bb, H), jnp.float32),
        grid_spec=pltpu.PrefetchScalarGridSpec(
            num_scalar_prefetch=0,
            grid=(nb, nt),                      # (batch blocks, time blocks); time innermost
            in_specs=[
                pl.BlockSpec((None, tb, bb, D), lambda b, t: (b, t, 0, 0)),   # x block
                pl.BlockSpec((D + H, 4 * H), lambda b, t: (0, 0)),            # [Wih^T;Whh^T] resident
                pl.BlockSpec((1, 4 * H), lambda b, t: (0, 0)),                # combined bias resident
            ],
            out_specs=pl.BlockSpec((None, tb, bb, H), lambda b, t: (b, t, 0, 0)),
            scratch_shapes=[
                pltpu.VMEM((bb, H), jnp.float32),   # h1
                pltpu.VMEM((bb, H), jnp.float32),   # c1
                pltpu.VMEM((bb, H), jnp.float32),   # h2
                pltpu.VMEM((bb, H), jnp.float32),   # c2
            ],
        ),
        compiler_params=pltpu.CompilerParams(
            dimension_semantics=("parallel", "arbitrary"),   # batch parallel, time sequential
        ),
    )(x_k, w_cat, bias)

    # (nb, T_pad, bb, H) -> (B, T, H)
    out = out_k.transpose(0, 2, 1, 3).reshape(B, T_pad, H)
    return out[:, :T, :]


def _reference(x, w_ih, w_hh, b_ih, b_hh):
    """Pure-JAX f32 reference mirroring torch.nn.LSTM (gate order i,f,g,o)."""
    B, T, D = x.shape
    H = w_hh.shape[1]
    w_ih_t = w_ih.T
    w_hh_t = w_hh.T
    b = (b_ih + b_hh)[None, :]

    def cell(carry, x_t):
        h, c = carry
        gates = x_t @ w_ih_t + h @ w_hh_t + b
        i = jax.nn.sigmoid(gates[:, 0 * H:1 * H])
        f = jax.nn.sigmoid(gates[:, 1 * H:2 * H])
        g = jnp.tanh(gates[:, 2 * H:3 * H])
        o = jax.nn.sigmoid(gates[:, 3 * H:4 * H])
        c_new = f * c + i * g
        h_new = o * jnp.tanh(c_new)
        return (h_new, c_new), h_new

    def run(inp):
        init = (jnp.zeros((B, H), jnp.float32), jnp.zeros((B, H), jnp.float32))
        _, hs = lax.scan(cell, init, jnp.transpose(inp, (1, 0, 2)))
        return jnp.transpose(hs, (1, 0, 2))

    return run(jnp.tanh(run(x)))


if __name__ == "__main__":
    # Small shapes: batch=2, seq=8, input_size = num_units = 32 (required for
    # the second LSTM pass to reuse the same weights).
    B, T, D, H = 2, 8, 32, 32

    key = jax.random.PRNGKey(0)
    k_x, k_wih, k_whh, k_bih, k_bhh = jax.random.split(key, 5)

    bound = 1.0 / jnp.sqrt(H)  # PyTorch default LSTM init: U(-1/sqrt(H), 1/sqrt(H))
    x = jax.random.normal(k_x, (B, T, D), dtype=jnp.float32)
    w_ih = jax.random.uniform(k_wih, (4 * H, D), jnp.float32, -bound, bound)
    w_hh = jax.random.uniform(k_whh, (4 * H, H), jnp.float32, -bound, bound)
    b_ih = jax.random.uniform(k_bih, (4 * H,), jnp.float32, -bound, bound)
    b_hh = jax.random.uniform(k_bhh, (4 * H,), jnp.float32, -bound, bound)

    ref = _reference(x, w_ih, w_hh, b_ih, b_hh)

    # Default config: one batch block, whole sequence in a single grid step.
    out = lstm_embedding_forward(x, w_ih, w_hh, b_ih, b_hh)
    jax.block_until_ready(out)
    assert out.shape == (B, T, H), out.shape
    err = float(jnp.max(jnp.abs(out - ref)))
    # Tolerance reflects bf16 MXU inputs (f32 accumulation) vs. the f32 reference.
    assert jnp.allclose(out, ref, rtol=2e-2, atol=2e-2), err

    # Batch-parallel config: one sequence per batch block ("parallel" axis ->
    # on v7x the two TensorCores each take half the batch).
    out2 = lstm_embedding_forward(x, w_ih, w_hh, b_ih, b_hh, batch_block=1)
    jax.block_until_ready(out2)
    err2 = float(jnp.max(jnp.abs(out2 - ref)))
    assert jnp.allclose(out2, ref, rtol=2e-2, atol=2e-2), err2

    print("KERNEL_OK")
</pallas_src>

<mosaic_0001>
module attributes {stable_mosaic.version = 11 : i64} {
  func.func @_lstm2_kernel(%arg0: i32, %arg1: i32, %arg2: memref<1x8x2x32xbf16, #tpu.memory_space<vmem>>, %arg3: memref<64x128xbf16, #tpu.memory_space<vmem>>, %arg4: memref<1x128xf32, #tpu.memory_space<vmem>>, %arg5: memref<1x8x2x32xf32, #tpu.memory_space<vmem>>, %arg6: memref<2x32xf32, #tpu.memory_space<vmem>>, %arg7: memref<2x32xf32, #tpu.memory_space<vmem>>, %arg8: memref<2x32xf32, #tpu.memory_space<vmem>>, %arg9: memref<2x32xf32, #tpu.memory_space<vmem>>) attributes {dimension_semantics = [#tpu.dimension_semantics<parallel>, #tpu.dimension_semantics<arbitrary>], iteration_bounds = array<i64: 1, 1>, scalar_prefetch = 0 : i64, scratch_operands = 4 : i64, tpu.core_type = #tpu.core_type<tc>, window_params = [{transform_indices = @transform_0, window_bounds = array<i64: 1, 8, 2, 32>}, {pipeline_mode = #tpu.pipeline_mode<synchronous>, transform_indices = @transform_1, window_bounds = array<i64: 64, 128>}, {pipeline_mode = #tpu.pipeline_mode<synchronous>, transform_indices = @transform_2, window_bounds = array<i64: 1, 128>}, {transform_indices = @transform_3, window_bounds = array<i64: 1, 8, 2, 32>}]} {
    %c0_i32 = arith.constant 0 : i32
    %0 = arith.cmpi eq, %arg1, %c0_i32 : i32
    %1 = arith.extui %0 : i1 to i32
    %c0_i32_0 = arith.constant 0 : i32
    %2 = arith.cmpi ne, %1, %c0_i32_0 : i32
    scf.if %2 {
      %cst_100 = arith.constant 0.000000e+00 : f32
      %413 = vector.broadcast %cst_100 : f32 to vector<2x32xf32>
      %c0_101 = arith.constant 0 : index
      %c0_102 = arith.constant 0 : index
      %414 = vector.load %arg6[%c0_101, %c0_102] : memref<2x32xf32, #tpu.memory_space<vmem>>, vector<2x32xf32>
      tpu.vector_store %arg6[%c0_101, %c0_102], %413 {strides = array<i32>} : memref<2x32xf32, #tpu.memory_space<vmem>>, vector<2x32xf32>,
      %c0_103 = arith.constant 0 : index
      %c0_104 = arith.constant 0 : index
      %415 = vector.load %arg7[%c0_103, %c0_104] : memref<2x32xf32, #tpu.memory_space<vmem>>, vector<2x32xf32>
      tpu.vector_store %arg7[%c0_103, %c0_104], %413 {strides = array<i32>} : memref<2x32xf32, #tpu.memory_space<vmem>>, vector<2x32xf32>,
      %c0_105 = arith.constant 0 : index
      %c0_106 = arith.constant 0 : index
      %416 = vector.load %arg8[%c0_105, %c0_106] : memref<2x32xf32, #tpu.memory_space<vmem>>, vector<2x32xf32>
      tpu.vector_store %arg8[%c0_105, %c0_106], %413 {strides = array<i32>} : memref<2x32xf32, #tpu.memory_space<vmem>>, vector<2x32xf32>,
      %c0_107 = arith.constant 0 : index
      %c0_108 = arith.constant 0 : index
      %417 = vector.load %arg9[%c0_107, %c0_108] : memref<2x32xf32, #tpu.memory_space<vmem>>, vector<2x32xf32>
      tpu.vector_store %arg9[%c0_107, %c0_108], %413 {strides = array<i32>} : memref<2x32xf32, #tpu.memory_space<vmem>>, vector<2x32xf32>,
    } else {
    }
    %c0 = arith.constant 0 : index
    %c0_1 = arith.constant 0 : index
    %3 = vector.load %arg3[%c0, %c0_1] : memref<64x128xbf16, #tpu.memory_space<vmem>>, vector<64x128xbf16>
    %c0_2 = arith.constant 0 : index
    %c0_3 = arith.constant 0 : index
    %4 = vector.load %arg4[%c0_2, %c0_3] : memref<1x128xf32, #tpu.memory_space<vmem>>, vector<1x128xf32>
    %5 = vector.shape_cast %4 : vector<1x128xf32> to vector<1x128xf32>
    %6 = vector.broadcast %5 : vector<1x128xf32> to vector<2x128xf32>
    %7 = tpu.iota {dimensions = array<i32: 1>} : vector<2x128xi32>
    %c64_i32 = arith.constant 64 : i32
    %8 = vector.broadcast %c64_i32 : i32 to vector<2x128xi32>
    %9 = arith.cmpi sge, %7, %8 : vector<2x128xi32>
    %c96_i32 = arith.constant 96 : i32
    %10 = vector.broadcast %c96_i32 : i32 to vector<2x128xi32>
    %11 = arith.cmpi slt, %7, %10 : vector<2x128xi32>
    %12 = arith.andi %9, %11 : vector<2x128xi1>
    %c0_4 = arith.constant 0 : index
    %c0_5 = arith.constant 0 : index
    %13 = vector.load %arg6[%c0_4, %c0_5] : memref<2x32xf32, #tpu.memory_space<vmem>>, vector<2x32xf32>
    %c0_6 = arith.constant 0 : index
    %c0_7 = arith.constant 0 : index
    %14 = vector.load %arg7[%c0_6, %c0_7] : memref<2x32xf32, #tpu.memory_space<vmem>>, vector<2x32xf32>
    %c0_8 = arith.constant 0 : index
    %c0_9 = arith.constant 0 : index
    %15 = vector.load %arg8[%c0_8, %c0_9] : memref<2x32xf32, #tpu.memory_space<vmem>>, vector<2x32xf32>
    %c0_10 = arith.constant 0 : index
    %c0_11 = arith.constant 0 : index
    %16 = vector.load %arg9[%c0_10, %c0_11] : memref<2x32xf32, #tpu.memory_space<vmem>>, vector<2x32xf32>
    %c0_i32_12 = arith.constant 0 : i32
    %c0_13 = arith.constant 0 : index
    %17 = arith.index_cast %c0_i32_12 : i32 to index
    %c0_14 = arith.constant 0 : index
    %c0_15 = arith.constant 0 : index
    %18 = vector.load %arg2[%c0_13, %17, %c0_14, %c0_15] : memref<1x8x2x32xbf16, #tpu.memory_space<vmem>>, vector<1x1x2x32xbf16>
    %19 = vector.shape_cast %18 : vector<1x1x2x32xbf16> to vector<2x32xbf16>
    %20 = arith.truncf %13 : vector<2x32xf32> to vector<2x32xbf16>
    %21 = tpu.concatenate %19, %20 in 1 : vector<2x32xbf16>, vector<2x32xbf16> -> vector<2x64xbf16>
    %cst = arith.constant dense<0.000000e+00> : vector<2x128xf32>
    %22 = tpu.matmul %21, %3, %cst {dimension_numbers = #tpu.dot_dimension_numbers<[1], [0], [0], [1], [0, 0, 1, 1], [], []>} : vector<2x64xbf16>, vector<64x128xbf16>, vector<2x128xf32> -> vector<2x128xf32>
    %23 = arith.addf %22, %6 : vector<2x128xf32>
    %24 = math.tanh %23 : vector<2x128xf32>
    %25 = arith.negf %23 : vector<2x128xf32>
    %26 = math.exp %25 : vector<2x128xf32>
    %cst_16 = arith.constant 1.000000e+00 : f32
    %27 = vector.broadcast %cst_16 : f32 to vector<2x128xf32>
    %28 = arith.addf %27, %26 : vector<2x128xf32>
    %29 = arith.divf %27, %28 : vector<2x128xf32>
    %30 = arith.select %12, %24, %29 : vector<2x128xi1>, vector<2x128xf32>
    %31 = vector.extract_strided_slice %30 {offsets = [0, 0], sizes = [2, 32], strides = [1, 1]} : vector<2x128xf32> to vector<2x32xf32>
    %32 = vector.extract_strided_slice %30 {offsets = [0, 32], sizes = [2, 32], strides = [1, 1]} : vector<2x128xf32> to vector<2x32xf32>
    %33 = vector.extract_strided_slice %30 {offsets = [0, 64], sizes = [2, 32], strides = [1, 1]} : vector<2x128xf32> to vector<2x32xf32>
    %34 = vector.extract_strided_slice %30 {offsets = [0, 96], sizes = [2, 32], strides = [1, 1]} : vector<2x128xf32> to vector<2x32xf32>
    %35 = arith.mulf %32, %14 : vector<2x32xf32>
    %36 = arith.mulf %31, %33 : vector<2x32xf32>
    %37 = arith.addf %35, %36 : vector<2x32xf32>
    %38 = math.tanh %37 : vector<2x32xf32>
    %39 = arith.mulf %34, %38 : vector<2x32xf32>
    %40 = math.tanh %39 : vector<2x32xf32>
    %41 = arith.truncf %40 : vector<2x32xf32> to vector<2x32xbf16>
    %42 = arith.truncf %15 : vector<2x32xf32> to vector<2x32xbf16>
    %43 = tpu.concatenate %41, %42 in 1 : vector<2x32xbf16>, vector<2x32xbf16> -> vector<2x64xbf16>
    %cst_17 = arith.constant dense<0.000000e+00> : vector<2x128xf32>
    %44 = tpu.matmul %43, %3, %cst_17 {dimension_numbers = #tpu.dot_dimension_numbers<[1], [0], [0], [1], [0, 0, 1, 1], [], []>} : vector<2x64xbf16>, vector<64x128xbf16>, vector<2x128xf32> -> vector<2x128xf32>
    %45 = arith.addf %44, %6 : vector<2x128xf32>
    %46 = math.tanh %45 : vector<2x128xf32>
    %47 = arith.negf %45 : vector<2x128xf32>
    %48 = math.exp %47 : vector<2x128xf32>
    %cst_18 = arith.constant 1.000000e+00 : f32
    %49 = vector.broadcast %cst_18 : f32 to vector<2x128xf32>
    %50 = arith.addf %49, %48 : vector<2x128xf32>
    %51 = arith.divf %49, %50 : vector<2x128xf32>
    %52 = arith.select %12, %46, %51 : vector<2x128xi1>, vector<2x128xf32>
    %53 = vector.extract_strided_slice %52 {offsets = [0, 0], sizes = [2, 32], strides = [1, 1]} : vector<2x128xf32> to vector<2x32xf32>
    %54 = vector.extract_strided_slice %52 {offsets = [0, 32], sizes = [2, 32], strides = [1, 1]} : vector<2x128xf32> to vector<2x32xf32>
    %55 = vector.extract_strided_slice %52 {offsets = [0, 64], sizes = [2, 32], strides = [1, 1]} : vector<2x128xf32> to vector<2x32xf32>
    %56 = vector.extract_strided_slice %52 {offsets = [0, 96], sizes = [2, 32], strides = [1, 1]} : vector<2x128xf32> to vector<2x32xf32>
    %57 = arith.mulf %54, %16 : vector<2x32xf32>
    %58 = arith.mulf %53, %55 : vector<2x32xf32>
    %59 = arith.addf %57, %58 : vector<2x32xf32>
    %60 = math.tanh %59 : vector<2x32xf32>
    %61 = arith.mulf %56, %60 : vector<2x32xf32>
    %c0_19 = arith.constant 0 : index
    %62 = arith.index_cast %c0_i32_12 : i32 to index
    %c0_20 = arith.constant 0 : index
    %c0_21 = arith.constant 0 : index
    %63 = vector.load %arg5[%c0_19, %62, %c0_20, %c0_21] : memref<1x8x2x32xf32, #tpu.memory_space<vmem>>, vector<1x1x2x32xf32>
    %64 = vector.shape_cast %63 : vector<1x1x2x32xf32> to vector<2x32xf32>
    %65 = vector.shape_cast %61 : vector<2x32xf32> to vector<1x1x2x32xf32>
    tpu.vector_store %arg5[%c0_19, %62, %c0_20, %c0_21], %65 {strides = array<i32>} : memref<1x8x2x32xf32, #tpu.memory_space<vmem>>, vector<1x1x2x32xf32>,
    %c1_i32 = arith.constant 1 : i32
    %c0_22 = arith.constant 0 : index
    %66 = arith.index_cast %c1_i32 : i32 to index
    %c0_23 = arith.constant 0 : index
    %c0_24 = arith.constant 0 : index
    %67 = vector.load %arg2[%c0_22, %66, %c0_23, %c0_24] : memref<1x8x2x32xbf16, #tpu.memory_space<vmem>>, vector<1x1x2x32xbf16>
    %68 = vector.shape_cast %67 : vector<1x1x2x32xbf16> to vector<2x32xbf16>
    %69 = arith.truncf %39 : vector<2x32xf32> to vector<2x32xbf16>
    %70 = tpu.concatenate %68, %69 in 1 : vector<2x32xbf16>, vector<2x32xbf16> -> vector<2x64xbf16>
    %cst_25 = arith.constant dense<0.000000e+00> : vector<2x128xf32>
    %71 = tpu.matmul %70, %3, %cst_25 {dimension_numbers = #tpu.dot_dimension_numbers<[1], [0], [0], [1], [0, 0, 1, 1], [], []>} : vector<2x64xbf16>, vector<64x128xbf16>, vector<2x128xf32> -> vector<2x128xf32>
    %72 = arith.addf %71, %6 : vector<2x128xf32>
    %73 = math.tanh %72 : vector<2x128xf32>
    %74 = arith.negf %72 : vector<2x128xf32>
    %75 = math.exp %74 : vector<2x128xf32>
    %cst_26 = arith.constant 1.000000e+00 : f32
    %76 = vector.broadcast %cst_26 : f32 to vector<2x128xf32>
    %77 = arith.addf %76, %75 : vector<2x128xf32>
    %78 = arith.divf %76, %77 : vector<2x128xf32>
    %79 = arith.select %12, %73, %78 : vector<2x128xi1>, vector<2x128xf32>
    %80 = vector.extract_strided_slice %79 {offsets = [0, 0], sizes = [2, 32], strides = [1, 1]} : vector<2x128xf32> to vector<2x32xf32>
    %81 = vector.extract_strided_slice %79 {offsets = [0, 32], sizes = [2, 32], strides = [1, 1]} : vector<2x128xf32> to vector<2x32xf32>
    %82 = vector.extract_strided_slice %79 {offsets = [0, 64], sizes = [2, 32], strides = [1, 1]} : vector<2x128xf32> to vector<2x32xf32>
    %83 = vector.extract_strided_slice %79 {offsets = [0, 96], sizes = [2, 32], strides = [1, 1]} : vector<2x128xf32> to vector<2x32xf32>
    %84 = arith.mulf %81, %37 : vector<2x32xf32>
    %85 = arith.mulf %80, %82 : vector<2x32xf32>
    %86 = arith.addf %84, %85 : vector<2x32xf32>
    %87 = math.tanh %86 : vector<2x32xf32>
    %88 = arith.mulf %83, %87 : vector<2x32xf32>
    %89 = math.tanh %88 : vector<2x32xf32>
    %90 = arith.truncf %89 : vector<2x32xf32> to vector<2x32xbf16>
    %91 = arith.truncf %61 : vector<2x32xf32> to vector<2x32xbf16>
    %92 = tpu.concatenate %90, %91 in 1 : vector<2x32xbf16>, vector<2x32xbf16> -> vector<2x64xbf16>
    %cst_27 = arith.constant dense<0.000000e+00> : vector<2x128xf32>
    %93 = tpu.matmul %92, %3, %cst_27 {dimension_numbers = #tpu.dot_dimension_numbers<[1], [0], [0], [1], [0, 0, 1, 1], [], []>} : vector<2x64xbf16>, vector<64x128xbf16>, vector<2x128xf32> -> vector<2x128xf32>
    %94 = arith.addf %93, %6 : vector<2x128xf32>
    %95 = math.tanh %94 : vector<2x128xf32>
    %96 = arith.negf %94 : vector<2x128xf32>
    %97 = math.exp %96 : vector<2x128xf32>
    %cst_28 = arith.constant 1.000000e+00 : f32
    %98 = vector.broadcast %cst_28 : f32 to vector<2x128xf32>
    %99 = arith.addf %98, %97 : vector<2x128xf32>
    %100 = arith.divf %98, %99 : vector<2x128xf32>
    %101 = arith.select %12, %95, %100 : vector<2x128xi1>, vector<2x128xf32>
    %102 = vector.extract_strided_slice %101 {offsets = [0, 0], sizes = [2, 32], strides = [1, 1]} : vector<2x128xf32> to vector<2x32xf32>
    %103 = vector.extract_strided_slice %101 {offsets = [0, 32], sizes = [2, 32], strides = [1, 1]} : vector<2x128xf32> to vector<2x32xf32>
    %104 = vector.extract_strided_slice %101 {offsets = [0, 64], sizes = [2, 32], strides = [1, 1]} : vector<2x128xf32> to vector<2x32xf32>
    %105 = vector.extract_strided_slice %101 {offsets = [0, 96], sizes = [2, 32], strides = [1, 1]} : vector<2x128xf32> to vector<2x32xf32>
    %106 = arith.mulf %103, %59 : vector<2x32xf32>
    %107 = arith.mulf %102, %104 : vector<2x32xf32>
    %108 = arith.addf %106, %107 : vector<2x32xf32>
    %109 = math.tanh %108 : vector<2x32xf32>
    %110 = arith.mulf %105, %109 : vector<2x32xf32>
    %c0_29 = arith.constant 0 : index
    %111 = arith.index_cast %c1_i32 : i32 to index
    %c0_30 = arith.constant 0 : index
    %c0_31 = arith.constant 0 : index
    %112 = vector.load %arg5[%c0_29, %111, %c0_30, %c0_31] : memref<1x8x2x32xf32, #tpu.memory_space<vmem>>, vector<1x1x2x32xf32>
    %113 = vector.shape_cast %112 : vector<1x1x2x32xf32> to vector<2x32xf32>
    %114 = vector.shape_cast %110 : vector<2x32xf32> to vector<1x1x2x32xf32>
    tpu.vector_store %arg5[%c0_29, %111, %c0_30, %c0_31], %114 {strides = array<i32>} : memref<1x8x2x32xf32, #tpu.memory_space<vmem>>, vector<1x1x2x32xf32>,
    %c2_i32 = arith.constant 2 : i32
    %c0_32 = arith.constant 0 : index
    %115 = arith.index_cast %c2_i32 : i32 to index
    %c0_33 = arith.constant 0 : index
    %c0_34 = arith.constant 0 : index
    %116 = vector.load %arg2[%c0_32, %115, %c0_33, %c0_34] : memref<1x8x2x32xbf16, #tpu.memory_space<vmem>>, vector<1x1x2x32xbf16>
    %117 = vector.shape_cast %116 : vector<1x1x2x32xbf16> to vector<2x32xbf16>
    %118 = arith.truncf %88 : vector<2x32xf32> to vector<2x32xbf16>
    %119 = tpu.concatenate %117, %118 in 1 : vector<2x32xbf16>, vector<2x32xbf16> -> vector<2x64xbf16>
    %cst_35 = arith.constant dense<0.000000e+00> : vector<2x128xf32>
    %120 = tpu.matmul %119, %3, %cst_35 {dimension_numbers = #tpu.dot_dimension_numbers<[1], [0], [0], [1], [0, 0, 1, 1], [], []>} : vector<2x64xbf16>, vector<64x128xbf16>, vector<2x128xf32> -> vector<2x128xf32>
    %121 = arith.addf %120, %6 : vector<2x128xf32>
    %122 = math.tanh %121 : vector<2x128xf32>
    %123 = arith.negf %121 : vector<2x128xf32>
    %124 = math.exp %123 : vector<2x128xf32>
    %cst_36 = arith.constant 1.000000e+00 : f32
    %125 = vector.broadcast %cst_36 : f32 to vector<2x128xf32>
    %126 = arith.addf %125, %124 : vector<2x128xf32>
    %127 = arith.divf %125, %126 : vector<2x128xf32>
    %128 = arith.select %12, %122, %127 : vector<2x128xi1>, vector<2x128xf32>
    %129 = vector.extract_strided_slice %128 {offsets = [0, 0], sizes = [2, 32], strides = [1, 1]} : vector<2x128xf32> to vector<2x32xf32>
    %130 = vector.extract_strided_slice %128 {offsets = [0, 32], sizes = [2, 32], strides = [1, 1]} : vector<2x128xf32> to vector<2x32xf32>
    %131 = vector.extract_strided_slice %128 {offsets = [0, 64], sizes = [2, 32], strides = [1, 1]} : vector<2x128xf32> to vector<2x32xf32>
    %132 = vector.extract_strided_slice %128 {offsets = [0, 96], sizes = [2, 32], strides = [1, 1]} : vector<2x128xf32> to vector<2x32xf32>
    %133 = arith.mulf %130, %86 : vector<2x32xf32>
    %134 = arith.mulf %129, %131 : vector<2x32xf32>
    %135 = arith.addf %133, %134 : vector<2x32xf32>
    %136 = math.tanh %135 : vector<2x32xf32>
    %137 = arith.mulf %132, %136 : vector<2x32xf32>
    %138 = math.tanh %137 : vector<2x32xf32>
    %139 = arith.truncf %138 : vector<2x32xf32> to vector<2x32xbf16>
    %140 = arith.truncf %110 : vector<2x32xf32> to vector<2x32xbf16>
    %141 = tpu.concatenate %139, %140 in 1 : vector<2x32xbf16>, vector<2x32xbf16> -> vector<2x64xbf16>
    %cst_37 = arith.constant dense<0.000000e+00> : vector<2x128xf32>
    %142 = tpu.matmul %141, %3, %cst_37 {dimension_numbers = #tpu.dot_dimension_numbers<[1], [0], [0], [1], [0, 0, 1, 1], [], []>} : vector<2x64xbf16>, vector<64x128xbf16>, vector<2x128xf32> -> vector<2x128xf32>
    %143 = arith.addf %142, %6 : vector<2x128xf32>
    %144 = math.tanh %143 : vector<2x128xf32>
    %145 = arith.negf %143 : vector<2x128xf32>
    %146 = math.exp %145 : vector<2x128xf32>
    %cst_38 = arith.constant 1.000000e+00 : f32
    %147 = vector.broadcast %cst_38 : f32 to vector<2x128xf32>
    %148 = arith.addf %147, %146 : vector<2x128xf32>
    %149 = arith.divf %147, %148 : vector<2x128xf32>
    %150 = arith.select %12, %144, %149 : vector<2x128xi1>, vector<2x128xf32>
    %151 = vector.extract_strided_slice %150 {offsets = [0, 0], sizes = [2, 32], strides = [1, 1]} : vector<2x128xf32> to vector<2x32xf32>
    %152 = vector.extract_strided_slice %150 {offsets = [0, 32], sizes = [2, 32], strides = [1, 1]} : vector<2x128xf32> to vector<2x32xf32>
    %153 = vector.extract_strided_slice %150 {offsets = [0, 64], sizes = [2, 32], strides = [1, 1]} : vector<2x128xf32> to vector<2x32xf32>
    %154 = vector.extract_strided_slice %150 {offsets = [0, 96], sizes = [2, 32], strides = [1, 1]} : vector<2x128xf32> to vector<2x32xf32>
    %155 = arith.mulf %152, %108 : vector<2x32xf32>
    %156 = arith.mulf %151, %153 : vector<2x32xf32>
    %157 = arith.addf %155, %156 : vector<2x32xf32>
    %158 = math.tanh %157 : vector<2x32xf32>
    %159 = arith.mulf %154, %158 : vector<2x32xf32>
    %c0_39 = arith.constant 0 : index
    %160 = arith.index_cast %c2_i32 : i32 to index
    %c0_40 = arith.constant 0 : index
    %c0_41 = arith.constant 0 : index
    %161 = vector.load %arg5[%c0_39, %160, %c0_40, %c0_41] : memref<1x8x2x32xf32, #tpu.memory_space<vmem>>, vector<1x1x2x32xf32>
    %162 = vector.shape_cast %161 : vector<1x1x2x32xf32> to vector<2x32xf32>
    %163 = vector.shape_cast %159 : vector<2x32xf32> to vector<1x1x2x32xf32>
    tpu.vector_store %arg5[%c0_39, %160, %c0_40, %c0_41], %163 {strides = array<i32>} : memref<1x8x2x32xf32, #tpu.memory_space<vmem>>, vector<1x1x2x32xf32>,
    %c3_i32 = arith.constant 3 : i32
    %c0_42 = arith.constant 0 : index
    %164 = arith.index_cast %c3_i32 : i32 to index
    %c0_43 = arith.constant 0 : index
    %c0_44 = arith.constant 0 : index
    %165 = vector.load %arg2[%c0_42, %164, %c0_43, %c0_44] : memref<1x8x2x32xbf16, #tpu.memory_space<vmem>>, vector<1x1x2x32xbf16>
    %166 = vector.shape_cast %165 : vector<1x1x2x32xbf16> to vector<2x32xbf16>
    %167 = arith.truncf %137 : vector<2x32xf32> to vector<2x32xbf16>
    %168 = tpu.concatenate %166, %167 in 1 : vector<2x32xbf16>, vector<2x32xbf16> -> vector<2x64xbf16>
    %cst_45 = arith.constant dense<0.000000e+00> : vector<2x128xf32>
    %169 = tpu.matmul %168, %3, %cst_45 {dimension_numbers = #tpu.dot_dimension_numbers<[1], [0], [0], [1], [0, 0, 1, 1], [], []>} : vector<2x64xbf16>, vector<64x128xbf16>, vector<2x128xf32> -> vector<2x128xf32>
    %170 = arith.addf %169, %6 : vector<2x128xf32>
    %171 = math.tanh %170 : vector<2x128xf32>
    %172 = arith.negf %170 : vector<2x128xf32>
    %173 = math.exp %172 : vector<2x128xf32>
    %cst_46 = arith.constant 1.000000e+00 : f32
    %174 = vector.broadcast %cst_46 : f32 to vector<2x128xf32>
    %175 = arith.addf %174, %173 : vector<2x128xf32>
    %176 = arith.divf %174, %175 : vector<2x128xf32>
    %177 = arith.select %12, %171, %176 : vector<2x128xi1>, vector<2x128xf32>
    %178 = vector.extract_strided_slice %177 {offsets = [0, 0], sizes = [2, 32], strides = [1, 1]} : vector<2x128xf32> to vector<2x32xf32>
    %179 = vector.extract_strided_slice %177 {offsets = [0, 32], sizes = [2, 32], strides = [1, 1]} : vector<2x128xf32> to vector<2x32xf32>
    %180 = vector.extract_strided_slice %177 {offsets = [0, 64], sizes = [2, 32], strides = [1, 1]} : vector<2x128xf32> to vector<2x32xf32>
    %181 = vector.extract_strided_slice %177 {offsets = [0, 96], sizes = [2, 32], strides = [1, 1]} : vector<2x128xf32> to vector<2x32xf32>
    %182 = arith.mulf %179, %135 : vector<2x32xf32>
    %183 = arith.mulf %178, %180 : vector<2x32xf32>
    %184 = arith.addf %182, %183 : vector<2x32xf32>
    %185 = math.tanh %184 : vector<2x32xf32>
    %186 = arith.mulf %181, %185 : vector<2x32xf32>
    %187 = math.tanh %186 : vector<2x32xf32>
    %188 = arith.truncf %187 : vector<2x32xf32> to vector<2x32xbf16>
    %189 = arith.truncf %159 : vector<2x32xf32> to vector<2x32xbf16>
    %190 = tpu.concatenate %188, %189 in 1 : vector<2x32xbf16>, vector<2x32xbf16> -> vector<2x64xbf16>
    %cst_47 = arith.constant dense<0.000000e+00> : vector<2x128xf32>
    %191 = tpu.matmul %190, %3, %cst_47 {dimension_numbers = #tpu.dot_dimension_numbers<[1], [0], [0], [1], [0, 0, 1, 1], [], []>} : vector<2x64xbf16>, vector<64x128xbf16>, vector<2x128xf32> -> vector<2x128xf32>
    %192 = arith.addf %191, %6 : vector<2x128xf32>
    %193 = math.tanh %192 : vector<2x128xf32>
    %194 = arith.negf %192 : vector<2x128xf32>
    %195 = math.exp %194 : vector<2x128xf32>
    %cst_48 = arith.constant 1.000000e+00 : f32
    %196 = vector.broadcast %cst_48 : f32 to vector<2x128xf32>
    %197 = arith.addf %196, %195 : vector<2x128xf32>
    %198 = arith.divf %196, %197 : vector<2x128xf32>
    %199 = arith.select %12, %193, %198 : vector<2x128xi1>, vector<2x128xf32>
    %200 = vector.extract_strided_slice %199 {offsets = [0, 0], sizes = [2, 32], strides = [1, 1]} : vector<2x128xf32> to vector<2x32xf32>
    %201 = vector.extract_strided_slice %199 {offsets = [0, 32], sizes = [2, 32], strides = [1, 1]} : vector<2x128xf32> to vector<2x32xf32>
    %202 = vector.extract_strided_slice %199 {offsets = [0, 64], sizes = [2, 32], strides = [1, 1]} : vector<2x128xf32> to vector<2x32xf32>
    %203 = vector.extract_strided_slice %199 {offsets = [0, 96], sizes = [2, 32], strides = [1, 1]} : vector<2x128xf32> to vector<2x32xf32>
    %204 = arith.mulf %201, %157 : vector<2x32xf32>
    %205 = arith.mulf %200, %202 : vector<2x32xf32>
    %206 = arith.addf %204, %205 : vector<2x32xf32>
    %207 = math.tanh %206 : vector<2x32xf32>
    %208 = arith.mulf %203, %207 : vector<2x32xf32>
    %c0_49 = arith.constant 0 : index
    %209 = arith.index_cast %c3_i32 : i32 to index
    %c0_50 = arith.constant 0 : index
    %c0_51 = arith.constant 0 : index
    %210 = vector.load %arg5[%c0_49, %209, %c0_50, %c0_51] : memref<1x8x2x32xf32, #tpu.memory_space<vmem>>, vector<1x1x2x32xf32>
    %211 = vector.shape_cast %210 : vector<1x1x2x32xf32> to vector<2x32xf32>
    %212 = vector.shape_cast %208 : vector<2x32xf32> to vector<1x1x2x32xf32>
    tpu.vector_store %arg5[%c0_49, %209, %c0_50, %c0_51], %212 {strides = array<i32>} : memref<1x8x2x32xf32, #tpu.memory_space<vmem>>, vector<1x1x2x32xf32>,
    %c4_i32 = arith.constant 4 : i32
    %c0_52 = arith.constant 0 : index
    %213 = arith.index_cast %c4_i32 : i32 to index
    %c0_53 = arith.constant 0 : index
    %c0_54 = arith.constant 0 : index
    %214 = vector.load %arg2[%c0_52, %213, %c0_53, %c0_54] : memref<1x8x2x32xbf16, #tpu.memory_space<vmem>>, vector<1x1x2x32xbf16>
    %215 = vector.shape_cast %214 : vector<1x1x2x32xbf16> to vector<2x32xbf16>
    %216 = arith.truncf %186 : vector<2x32xf32> to vector<2x32xbf16>
    %217 = tpu.concatenate %215, %216 in 1 : vector<2x32xbf16>, vector<2x32xbf16> -> vector<2x64xbf16>
    %cst_55 = arith.constant dense<0.000000e+00> : vector<2x128xf32>
    %218 = tpu.matmul %217, %3, %cst_55 {dimension_numbers = #tpu.dot_dimension_numbers<[1], [0], [0], [1], [0, 0, 1, 1], [], []>} : vector<2x64xbf16>, vector<64x128xbf16>, vector<2x128xf32> -> vector<2x128xf32>
    %219 = arith.addf %218, %6 : vector<2x128xf32>
    %220 = math.tanh %219 : vector<2x128xf32>
    %221 = arith.negf %219 : vector<2x128xf32>
    %222 = math.exp %221 : vector<2x128xf32>
    %cst_56 = arith.constant 1.000000e+00 : f32
    %223 = vector.broadcast %cst_56 : f32 to vector<2x128xf32>
    %224 = arith.addf %223, %222 : vector<2x128xf32>
    %225 = arith.divf %223, %224 : vector<2x128xf32>
    %226 = arith.select %12, %220, %225 : vector<2x128xi1>, vector<2x128xf32>
    %227 = vector.extract_strided_slice %226 {offsets = [0, 0], sizes = [2, 32], strides = [1, 1]} : vector<2x128xf32> to vector<2x32xf32>
    %228 = vector.extract_strided_slice %226 {offsets = [0, 32], sizes = [2, 32], strides = [1, 1]} : vector<2x128xf32> to vector<2x32xf32>
    %229 = vector.extract_strided_slice %226 {offsets = [0, 64], sizes = [2, 32], strides = [1, 1]} : vector<2x128xf32> to vector<2x32xf32>
    %230 = vector.extract_strided_slice %226 {offsets = [0, 96], sizes = [2, 32], strides = [1, 1]} : vector<2x128xf32> to vector<2x32xf32>
    %231 = arith.mulf %228, %184 : vector<2x32xf32>
    %232 = arith.mulf %227, %229 : vector<2x32xf32>
    %233 = arith.addf %231, %232 : vector<2x32xf32>
    %234 = math.tanh %233 : vector<2x32xf32>
    %235 = arith.mulf %230, %234 : vector<2x32xf32>
    %236 = math.tanh %235 : vector<2x32xf32>
    %237 = arith.truncf %236 : vector<2x32xf32> to vector<2x32xbf16>
    %238 = arith.truncf %208 : vector<2x32xf32> to vector<2x32xbf16>
    %239 = tpu.concatenate %237, %238 in 1 : vector<2x32xbf16>, vector<2x32xbf16> -> vector<2x64xbf16>
    %cst_57 = arith.constant dense<0.000000e+00> : vector<2x128xf32>
    %240 = tpu.matmul %239, %3, %cst_57 {dimension_numbers = #tpu.dot_dimension_numbers<[1], [0], [0], [1], [0, 0, 1, 1], [], []>} : vector<2x64xbf16>, vector<64x128xbf16>, vector<2x128xf32> -> vector<2x128xf32>
    %241 = arith.addf %240, %6 : vector<2x128xf32>
    %242 = math.tanh %241 : vector<2x128xf32>
    %243 = arith.negf %241 : vector<2x128xf32>
    %244 = math.exp %243 : vector<2x128xf32>
    %cst_58 = arith.constant 1.000000e+00 : f32
    %245 = vector.broadcast %cst_58 : f32 to vector<2x128xf32>
    %246 = arith.addf %245, %244 : vector<2x128xf32>
    %247 = arith.divf %245, %246 : vector<2x128xf32>
    %248 = arith.select %12, %242, %247 : vector<2x128xi1>, vector<2x128xf32>
    %249 = vector.extract_strided_slice %248 {offsets = [0, 0], sizes = [2, 32], strides = [1, 1]} : vector<2x128xf32> to vector<2x32xf32>
    %250 = vector.extract_strided_slice %248 {offsets = [0, 32], sizes = [2, 32], strides = [1, 1]} : vector<2x128xf32> to vector<2x32xf32>
    %251 = vector.extract_strided_slice %248 {offsets = [0, 64], sizes = [2, 32], strides = [1, 1]} : vector<2x128xf32> to vector<2x32xf32>
    %252 = vector.extract_strided_slice %248 {offsets = [0, 96], sizes = [2, 32], strides = [1, 1]} : vector<2x128xf32> to vector<2x32xf32>
    %253 = arith.mulf %250, %206 : vector<2x32xf32>
    %254 = arith.mulf %249, %251 : vector<2x32xf32>
    %255 = arith.addf %253, %254 : vector<2x32xf32>
    %256 = math.tanh %255 : vector<2x32xf32>
    %257 = arith.mulf %252, %256 : vector<2x32xf32>
    %c0_59 = arith.constant 0 : index
    %258 = arith.index_cast %c4_i32 : i32 to index
    %c0_60 = arith.constant 0 : index
    %c0_61 = arith.constant 0 : index
    %259 = vector.load %arg5[%c0_59, %258, %c0_60, %c0_61] : memref<1x8x2x32xf32, #tpu.memory_space<vmem>>, vector<1x1x2x32xf32>
    %260 = vector.shape_cast %259 : vector<1x1x2x32xf32> to vector<2x32xf32>
    %261 = vector.shape_cast %257 : vector<2x32xf32> to vector<1x1x2x32xf32>
    tpu.vector_store %arg5[%c0_59, %258, %c0_60, %c0_61], %261 {strides = array<i32>} : memref<1x8x2x32xf32, #tpu.memory_space<vmem>>, vector<1x1x2x32xf32>,
    %c5_i32 = arith.constant 5 : i32
    %c0_62 = arith.constant 0 : index
    %262 = arith.index_cast %c5_i32 : i32 to index
    %c0_63 = arith.constant 0 : index
    %c0_64 = arith.constant 0 : index
    %263 = vector.load %arg2[%c0_62, %262, %c0_63, %c0_64] : memref<1x8x2x32xbf16, #tpu.memory_space<vmem>>, vector<1x1x2x32xbf16>
    %264 = vector.shape_cast %263 : vector<1x1x2x32xbf16> to vector<2x32xbf16>
    %265 = arith.truncf %235 : vector<2x32xf32> to vector<2x32xbf16>
    %266 = tpu.concatenate %264, %265 in 1 : vector<2x32xbf16>, vector<2x32xbf16> -> vector<2x64xbf16>
    %cst_65 = arith.constant dense<0.000000e+00> : vector<2x128xf32>
    %267 = tpu.matmul %266, %3, %cst_65 {dimension_numbers = #tpu.dot_dimension_numbers<[1], [0], [0], [1], [0, 0, 1, 1], [], []>} : vector<2x64xbf16>, vector<64x128xbf16>, vector<2x128xf32> -> vector<2x128xf32>
    %268 = arith.addf %267, %6 : vector<2x128xf32>
    %269 = math.tanh %268 : vector<2x128xf32>
    %270 = arith.negf %268 : vector<2x128xf32>
    %271 = math.exp %270 : vector<2x128xf32>
    %cst_66 = arith.constant 1.000000e+00 : f32
    %272 = vector.broadcast %cst_66 : f32 to vector<2x128xf32>
    %273 = arith.addf %272, %271 : vector<2x128xf32>
    %274 = arith.divf %272, %273 : vector<2x128xf32>
    %275 = arith.select %12, %269, %274 : vector<2x128xi1>, vector<2x128xf32>
    %276 = vector.extract_strided_slice %275 {offsets = [0, 0], sizes = [2, 32], strides = [1, 1]} : vector<2x128xf32> to vector<2x32xf32>
    %277 = vector.extract_strided_slice %275 {offsets = [0, 32], sizes = [2, 32], strides = [1, 1]} : vector<2x128xf32> to vector<2x32xf32>
    %278 = vector.extract_strided_slice %275 {offsets = [0, 64], sizes = [2, 32], strides = [1, 1]} : vector<2x128xf32> to vector<2x32xf32>
    %279 = vector.extract_strided_slice %275 {offsets = [0, 96], sizes = [2, 32], strides = [1, 1]} : vector<2x128xf32> to vector<2x32xf32>
    %280 = arith.mulf %277, %233 : vector<2x32xf32>
    %281 = arith.mulf %276, %278 : vector<2x32xf32>
    %282 = arith.addf %280, %281 : vector<2x32xf32>
    %283 = math.tanh %282 : vector<2x32xf32>
    %284 = arith.mulf %279, %283 : vector<2x32xf32>
    %285 = math.tanh %284 : vector<2x32xf32>
    %286 = arith.truncf %285 : vector<2x32xf32> to vector<2x32xbf16>
    %287 = arith.truncf %257 : vector<2x32xf32> to vector<2x32xbf16>
    %288 = tpu.concatenate %286, %287 in 1 : vector<2x32xbf16>, vector<2x32xbf16> -> vector<2x64xbf16>
    %cst_67 = arith.constant dense<0.000000e+00> : vector<2x128xf32>
    %289 = tpu.matmul %288, %3, %cst_67 {dimension_numbers = #tpu.dot_dimension_numbers<[1], [0], [0], [1], [0, 0, 1, 1], [], []>} : vector<2x64xbf16>, vector<64x128xbf16>, vector<2x128xf32> -> vector<2x128xf32>
    %290 = arith.addf %289, %6 : vector<2x128xf32>
    %291 = math.tanh %290 : vector<2x128xf32>
    %292 = arith.negf %290 : vector<2x128xf32>
    %293 = math.exp %292 : vector<2x128xf32>
    %cst_68 = arith.constant 1.000000e+00 : f32
    %294 = vector.broadcast %cst_68 : f32 to vector<2x128xf32>
    %295 = arith.addf %294, %293 : vector<2x128xf32>
    %296 = arith.divf %294, %295 : vector<2x128xf32>
    %297 = arith.select %12, %291, %296 : vector<2x128xi1>, vector<2x128xf32>
    %298 = vector.extract_strided_slice %297 {offsets = [0, 0], sizes = [2, 32], strides = [1, 1]} : vector<2x128xf32> to vector<2x32xf32>
    %299 = vector.extract_strided_slice %297 {offsets = [0, 32], sizes = [2, 32], strides = [1, 1]} : vector<2x128xf32> to vector<2x32xf32>
    %300 = vector.extract_strided_slice %297 {offsets = [0, 64], sizes = [2, 32], strides = [1, 1]} : vector<2x128xf32> to vector<2x32xf32>
    %301 = vector.extract_strided_slice %297 {offsets = [0, 96], sizes = [2, 32], strides = [1, 1]} : vector<2x128xf32> to vector<2x32xf32>
    %302 = arith.mulf %299, %255 : vector<2x32xf32>
    %303 = arith.mulf %298, %300 : vector<2x32xf32>
    %304 = arith.addf %302, %303 : vector<2x32xf32>
    %305 = math.tanh %304 : vector<2x32xf32>
    %306 = arith.mulf %301, %305 : vector<2x32xf32>
    %c0_69 = arith.constant 0 : index
    %307 = arith.index_cast %c5_i32 : i32 to index
    %c0_70 = arith.constant 0 : index
    %c0_71 = arith.constant 0 : index
    %308 = vector.load %arg5[%c0_69, %307, %c0_70, %c0_71] : memref<1x8x2x32xf32, #tpu.memory_space<vmem>>, vector<1x1x2x32xf32>
    %309 = vector.shape_cast %308 : vector<1x1x2x32xf32> to vector<2x32xf32>
    %310 = vector.shape_cast %306 : vector<2x32xf32> to vector<1x1x2x32xf32>
    tpu.vector_store %arg5[%c0_69, %307, %c0_70, %c0_71], %310 {strides = array<i32>} : memref<1x8x2x32xf32, #tpu.memory_space<vmem>>, vector<1x1x2x32xf32>,
    %c6_i32 = arith.constant 6 : i32
    %c0_72 = arith.constant 0 : index
    %311 = arith.index_cast %c6_i32 : i32 to index
    %c0_73 = arith.constant 0 : index
    %c0_74 = arith.constant 0 : index
    %312 = vector.load %arg2[%c0_72, %311, %c0_73, %c0_74] : memref<1x8x2x32xbf16, #tpu.memory_space<vmem>>, vector<1x1x2x32xbf16>
    %313 = vector.shape_cast %312 : vector<1x1x2x32xbf16> to vector<2x32xbf16>
    %314 = arith.truncf %284 : vector<2x32xf32> to vector<2x32xbf16>
    %315 = tpu.concatenate %313, %314 in 1 : vector<2x32xbf16>, vector<2x32xbf16> -> vector<2x64xbf16>
    %cst_75 = arith.constant dense<0.000000e+00> : vector<2x128xf32>
    %316 = tpu.matmul %315, %3, %cst_75 {dimension_numbers = #tpu.dot_dimension_numbers<[1], [0], [0], [1], [0, 0, 1, 1], [], []>} : vector<2x64xbf16>, vector<64x128xbf16>, vector<2x128xf32> -> vector<2x128xf32>
    %317 = arith.addf %316, %6 : vector<2x128xf32>
    %318 = math.tanh %317 : vector<2x128xf32>
    %319 = arith.negf %317 : vector<2x128xf32>
    %320 = math.exp %319 : vector<2x128xf32>
    %cst_76 = arith.constant 1.000000e+00 : f32
    %321 = vector.broadcast %cst_76 : f32 to vector<2x128xf32>
    %322 = arith.addf %321, %320 : vector<2x128xf32>
    %323 = arith.divf %321, %322 : vector<2x128xf32>
    %324 = arith.select %12, %318, %323 : vector<2x128xi1>, vector<2x128xf32>
    %325 = vector.extract_strided_slice %324 {offsets = [0, 0], sizes = [2, 32], strides = [1, 1]} : vector<2x128xf32> to vector<2x32xf32>
    %326 = vector.extract_strided_slice %324 {offsets = [0, 32], sizes = [2, 32], strides = [1, 1]} : vector<2x128xf32> to vector<2x32xf32>
    %327 = vector.extract_strided_slice %324 {offsets = [0, 64], sizes = [2, 32], strides = [1, 1]} : vector<2x128xf32> to vector<2x32xf32>
    %328 = vector.extract_strided_slice %324 {offsets = [0, 96], sizes = [2, 32], strides = [1, 1]} : vector<2x128xf32> to vector<2x32xf32>
    %329 = arith.mulf %326, %282 : vector<2x32xf32>
    %330 = arith.mulf %325, %327 : vector<2x32xf32>
    %331 = arith.addf %329, %330 : vector<2x32xf32>
    %332 = math.tanh %331 : vector<2x32xf32>
    %333 = arith.mulf %328, %332 : vector<2x32xf32>
    %334 = math.tanh %333 : vector<2x32xf32>
    %335 = arith.truncf %334 : vector<2x32xf32> to vector<2x32xbf16>
    %336 = arith.truncf %306 : vector<2x32xf32> to vector<2x32xbf16>
    %337 = tpu.concatenate %335, %336 in 1 : vector<2x32xbf16>, vector<2x32xbf16> -> vector<2x64xbf16>
    %cst_77 = arith.constant dense<0.000000e+00> : vector<2x128xf32>
    %338 = tpu.matmul %337, %3, %cst_77 {dimension_numbers = #tpu.dot_dimension_numbers<[1], [0], [0], [1], [0, 0, 1, 1], [], []>} : vector<2x64xbf16>, vector<64x128xbf16>, vector<2x128xf32> -> vector<2x128xf32>
    %339 = arith.addf %338, %6 : vector<2x128xf32>
    %340 = math.tanh %339 : vector<2x128xf32>
    %341 = arith.negf %339 : vector<2x128xf32>
    %342 = math.exp %341 : vector<2x128xf32>
    %cst_78 = arith.constant 1.000000e+00 : f32
    %343 = vector.broadcast %cst_78 : f32 to vector<2x128xf32>
    %344 = arith.addf %343, %342 : vector<2x128xf32>
    %345 = arith.divf %343, %344 : vector<2x128xf32>
    %346 = arith.select %12, %340, %345 : vector<2x128xi1>, vector<2x128xf32>
    %347 = vector.extract_strided_slice %346 {offsets = [0, 0], sizes = [2, 32], strides = [1, 1]} : vector<2x128xf32> to vector<2x32xf32>
    %348 = vector.extract_strided_slice %346 {offsets = [0, 32], sizes = [2, 32], strides = [1, 1]} : vector<2x128xf32> to vector<2x32xf32>
    %349 = vector.extract_strided_slice %346 {offsets = [0, 64], sizes = [2, 32], strides = [1, 1]} : vector<2x128xf32> to vector<2x32xf32>
    %350 = vector.extract_strided_slice %346 {offsets = [0, 96], sizes = [2, 32], strides = [1, 1]} : vector<2x128xf32> to vector<2x32xf32>
    %351 = arith.mulf %348, %304 : vector<2x32xf32>
    %352 = arith.mulf %347, %349 : vector<2x32xf32>
    %353 = arith.addf %351, %352 : vector<2x32xf32>
    %354 = math.tanh %353 : vector<2x32xf32>
    %355 = arith.mulf %350, %354 : vector<2x32xf32>
    %c0_79 = arith.constant 0 : index
    %356 = arith.index_cast %c6_i32 : i32 to index
    %c0_80 = arith.constant 0 : index
    %c0_81 = arith.constant 0 : index
    %357 = vector.load %arg5[%c0_79, %356, %c0_80, %c0_81] : memref<1x8x2x32xf32, #tpu.memory_space<vmem>>, vector<1x1x2x32xf32>
    %358 = vector.shape_cast %357 : vector<1x1x2x32xf32> to vector<2x32xf32>
    %359 = vector.shape_cast %355 : vector<2x32xf32> to vector<1x1x2x32xf32>
    tpu.vector_store %arg5[%c0_79, %356, %c0_80, %c0_81], %359 {strides = array<i32>} : memref<1x8x2x32xf32, #tpu.memory_space<vmem>>, vector<1x1x2x32xf32>,
    %c7_i32 = arith.constant 7 : i32
    %c0_82 = arith.constant 0 : index
    %360 = arith.index_cast %c7_i32 : i32 to index
    %c0_83 = arith.constant 0 : index
    %c0_84 = arith.constant 0 : index
    %361 = vector.load %arg2[%c0_82, %360, %c0_83, %c0_84] : memref<1x8x2x32xbf16, #tpu.memory_space<vmem>>, vector<1x1x2x32xbf16>
    %362 = vector.shape_cast %361 : vector<1x1x2x32xbf16> to vector<2x32xbf16>
    %363 = arith.truncf %333 : vector<2x32xf32> to vector<2x32xbf16>
    %364 = tpu.concatenate %362, %363 in 1 : vector<2x32xbf16>, vector<2x32xbf16> -> vector<2x64xbf16>
    %cst_85 = arith.constant dense<0.000000e+00> : vector<2x128xf32>
    %365 = tpu.matmul %364, %3, %cst_85 {dimension_numbers = #tpu.dot_dimension_numbers<[1], [0], [0], [1], [0, 0, 1, 1], [], []>} : vector<2x64xbf16>, vector<64x128xbf16>, vector<2x128xf32> -> vector<2x128xf32>
    %366 = arith.addf %365, %6 : vector<2x128xf32>
    %367 = math.tanh %366 : vector<2x128xf32>
    %368 = arith.negf %366 : vector<2x128xf32>
    %369 = math.exp %368 : vector<2x128xf32>
    %cst_86 = arith.constant 1.000000e+00 : f32
    %370 = vector.broadcast %cst_86 : f32 to vector<2x128xf32>
    %371 = arith.addf %370, %369 : vector<2x128xf32>
    %372 = arith.divf %370, %371 : vector<2x128xf32>
    %373 = arith.select %12, %367, %372 : vector<2x128xi1>, vector<2x128xf32>
    %374 = vector.extract_strided_slice %373 {offsets = [0, 0], sizes = [2, 32], strides = [1, 1]} : vector<2x128xf32> to vector<2x32xf32>
    %375 = vector.extract_strided_slice %373 {offsets = [0, 32], sizes = [2, 32], strides = [1, 1]} : vector<2x128xf32> to vector<2x32xf32>
    %376 = vector.extract_strided_slice %373 {offsets = [0, 64], sizes = [2, 32], strides = [1, 1]} : vector<2x128xf32> to vector<2x32xf32>
    %377 = vector.extract_strided_slice %373 {offsets = [0, 96], sizes = [2, 32], strides = [1, 1]} : vector<2x128xf32> to vector<2x32xf32>
    %378 = arith.mulf %375, %331 : vector<2x32xf32>
    %379 = arith.mulf %374, %376 : vector<2x32xf32>
    %380 = arith.addf %378, %379 : vector<2x32xf32>
    %381 = math.tanh %380 : vector<2x32xf32>
    %382 = arith.mulf %377, %381 : vector<2x32xf32>
    %383 = math.tanh %382 : vector<2x32xf32>
    %384 = arith.truncf %383 : vector<2x32xf32> to vector<2x32xbf16>
    %385 = arith.truncf %355 : vector<2x32xf32> to vector<2x32xbf16>
    %386 = tpu.concatenate %384, %385 in 1 : vector<2x32xbf16>, vector<2x32xbf16> -> vector<2x64xbf16>
    %cst_87 = arith.constant dense<0.000000e+00> : vector<2x128xf32>
    %387 = tpu.matmul %386, %3, %cst_87 {dimension_numbers = #tpu.dot_dimension_numbers<[1], [0], [0], [1], [0, 0, 1, 1], [], []>} : vector<2x64xbf16>, vector<64x128xbf16>, vector<2x128xf32> -> vector<2x128xf32>
    %388 = arith.addf %387, %6 : vector<2x128xf32>
    %389 = math.tanh %388 : vector<2x128xf32>
    %390 = arith.negf %388 : vector<2x128xf32>
    %391 = math.exp %390 : vector<2x128xf32>
    %cst_88 = arith.constant 1.000000e+00 : f32
    %392 = vector.broadcast %cst_88 : f32 to vector<2x128xf32>
    %393 = arith.addf %392, %391 : vector<2x128xf32>
    %394 = arith.divf %392, %393 : vector<2x128xf32>
    %395 = arith.select %12, %389, %394 : vector<2x128xi1>, vector<2x128xf32>
    %396 = vector.extract_strided_slice %395 {offsets = [0, 0], sizes = [2, 32], strides = [1, 1]} : vector<2x128xf32> to vector<2x32xf32>
    %397 = vector.extract_strided_slice %395 {offsets = [0, 32], sizes = [2, 32], strides = [1, 1]} : vector<2x128xf32> to vector<2x32xf32>
    %398 = vector.extract_strided_slice %395 {offsets = [0, 64], sizes = [2, 32], strides = [1, 1]} : vector<2x128xf32> to vector<2x32xf32>
    %399 = vector.extract_strided_slice %395 {offsets = [0, 96], sizes = [2, 32], strides = [1, 1]} : vector<2x128xf32> to vector<2x32xf32>
    %400 = arith.mulf %397, %353 : vector<2x32xf32>
    %401 = arith.mulf %396, %398 : vector<2x32xf32>
    %402 = arith.addf %400, %401 : vector<2x32xf32>
    %403 = math.tanh %402 : vector<2x32xf32>
    %404 = arith.mulf %399, %403 : vector<2x32xf32>
    %c0_89 = arith.constant 0 : index
    %405 = arith.index_cast %c7_i32 : i32 to index
    %c0_90 = arith.constant 0 : index
    %c0_91 = arith.constant 0 : index
    %406 = vector.load %arg5[%c0_89, %405, %c0_90, %c0_91] : memref<1x8x2x32xf32, #tpu.memory_space<vmem>>, vector<1x1x2x32xf32>
    %407 = vector.shape_cast %406 : vector<1x1x2x32xf32> to vector<2x32xf32>
    %408 = vector.shape_cast %404 : vector<2x32xf32> to vector<1x1x2x32xf32>
    tpu.vector_store %arg5[%c0_89, %405, %c0_90, %c0_91], %408 {strides = array<i32>} : memref<1x8x2x32xf32, #tpu.memory_space<vmem>>, vector<1x1x2x32xf32>,
    %c8_i32 = arith.constant 8 : i32
    %c0_92 = arith.constant 0 : index
    %c0_93 = arith.constant 0 : index
    %409 = vector.load %arg6[%c0_92, %c0_93] : memref<2x32xf32, #tpu.memory_space<vmem>>, vector<2x32xf32>
    tpu.vector_store %arg6[%c0_92, %c0_93], %382 {strides = array<i32>} : memref<2x32xf32, #tpu.memory_space<vmem>>, vector<2x32xf32>,
    %c0_94 = arith.constant 0 : index
    %c0_95 = arith.constant 0 : index
    %410 = vector.load %arg7[%c0_94, %c0_95] : memref<2x32xf32, #tpu.memory_space<vmem>>, vector<2x32xf32>
    tpu.vector_store %arg7[%c0_94, %c0_95], %380 {strides = array<i32>} : memref<2x32xf32, #tpu.memory_space<vmem>>, vector<2x32xf32>,
    %c0_96 = arith.constant 0 : index
    %c0_97 = arith.constant 0 : index
    %411 = vector.load %arg8[%c0_96, %c0_97] : memref<2x32xf32, #tpu.memory_space<vmem>>, vector<2x32xf32>
    tpu.vector_store %arg8[%c0_96, %c0_97], %404 {strides = array<i32>} : memref<2x32xf32, #tpu.memory_space<vmem>>, vector<2x32xf32>,
    %c0_98 = arith.constant 0 : index
    %c0_99 = arith.constant 0 : index
    %412 = vector.load %arg9[%c0_98, %c0_99] : memref<2x32xf32, #tpu.memory_space<vmem>>, vector<2x32xf32>
    tpu.vector_store %arg9[%c0_98, %c0_99], %402 {strides = array<i32>} : memref<2x32xf32, #tpu.memory_space<vmem>>, vector<2x32xf32>,
    return
  }
  func.func @transform_0(%arg0: i32, %arg1: i32) -> (i32, i32, i32, i32) {
    %c0_i32 = arith.constant 0 : i32
    %c0_i32_0 = arith.constant 0 : i32
    %c0_i32_1 = arith.constant 0 : i32
    return %arg0, %arg1, %c0_i32, %c0_i32_0 : i32, i32, i32, i32
  }
  func.func @transform_1(%arg0: i32, %arg1: i32) -> (i32, i32) {
    %c0_i32 = arith.constant 0 : i32
    %c0_i32_0 = arith.constant 0 : i32
    %c0_i32_1 = arith.constant 0 : i32
    return %c0_i32, %c0_i32_0 : i32, i32
  }
  func.func @transform_2(%arg0: i32, %arg1: i32) -> (i32, i32) {
    %c0_i32 = arith.constant 0 : i32
    %c0_i32_0 = arith.constant 0 : i32
    %c0_i32_1 = arith.constant 0 : i32
    return %c0_i32, %c0_i32_0 : i32, i32
  }
  func.func @transform_3(%arg0: i32, %arg1: i32) -> (i32, i32, i32, i32) {
    %c0_i32 = arith.constant 0 : i32
    %c0_i32_0 = arith.constant 0 : i32
    %c0_i32_1 = arith.constant 0 : i32
    return %arg0, %arg1, %c0_i32, %c0_i32_0 : i32, i32, i32, i32
  }
}

</mosaic_0001>

<llo_original>
// kernel: tpu_custom_call.1
$region0: #{tpu_custom_call.1}
  #allocation0 [shape = 'u32[]', space=smem, size = 0x4, offset = 0x4, fixed_abs, tag = 'smem constant byte address 0x4 - core index']
  #allocation1 [shape = 'u32[144,128]{1,0:T(1,128)}', space=vmem, size = 0x12000, scoped, tag = 'internal scratch']
  #allocation2 [shape = 'f32[2,32]{1,0:T(2,128)}', space=vmem, size = 0x400, scoped, tag = 'scratch operand']
  #allocation3 [shape = 'f32[2,32]{1,0:T(2,128)}', space=vmem, size = 0x400, scoped, tag = 'scratch operand']
  #allocation4 [shape = 'f32[2,32]{1,0:T(2,128)}', space=vmem, size = 0x400, scoped, tag = 'scratch operand']
  #allocation5 [shape = 'f32[2,32]{1,0:T(2,128)}', space=vmem, size = 0x400, scoped, tag = 'scratch operand']
  %s0 = inlined_call_operand.hbm [shape: bf16[1,8,2,32], index: 0, kind: input, shape index: {}]
  %s1 = inlined_call_operand.hbm [shape: bf16[64,128], index: 1, kind: input, shape index: {}]
  %s2 = inlined_call_operand.vmem [shape: f32[1,128], index: 2, kind: input, shape index: {}]
  %s3 = inlined_call_operand.hbm [shape: f32[1,8,2,32], index: 3, kind: output, shape index: {}]
  %s4 = sld [smem:[#allocation0]]
  $region34: #{tpu_custom_call.1} parent=0
    _
  %s6 = ssub.s32 1, %s4
  %s7 = scalar_select 0, %s6, %s4
  $region1: #{tpu_custom_call.1} parent=0
    #allocation6 [shape = 'u8[4096]{0}', space=vmem, size = 0x1000, scoped, tag = 'input window, operand 0, single buffered']
    #allocation7 [shape = 's32[1]{0}', space=sflag, size = 0x4, scoped, tag = 'scoped memory for tpu_custom_call.1']
    #allocation8 [shape = 's32[1]{0}', space=sflag, size = 0x4, scoped, tag = 'scoped memory for tpu_custom_call.1']
    #allocation9 [shape = 'u8[16384]{0}', space=vmem, size = 0x4000, scoped, tag = 'input window, operand 1, single buffered']
    #allocation10 [shape = 's32[1]{0}', space=sflag, size = 0x4, scoped, tag = 'scoped memory for tpu_custom_call.1']
    #allocation11 [shape = 'u8[8192]{0}', space=vmem, size = 0x2000, scoped, tag = 'output window, operand 0, single buffered']
    %8 = vsyncpa [#allocation7], 0
    %9 = vsyncpa [#allocation10], 0
    %10 = vsyncpa [#allocation8], 0
    // Predicated region
    $region2: #{tpu_custom_call.1} parent=1 // pred_check
      _
    $region3: #{tpu_custom_call.1} parent=1 // pred_check_branch
      %12 = sbr.rel (0) target = $region5
    $region4: #{tpu_custom_call.1} parent=1 // pred_region
      %s14 = ssub.s32 128, 128
      %15 = vsyncadd [#allocation7], %s14
      %s16 = sshll.u32 [#allocation6], 4
      %s17 = int_to_ptr.vmem [resolvable:$true] %s16
      %22 = dma.hbm_to_vmem [thread:$0]  %s0, 128, %s17, [#allocation7], 16, 16, 1
    $region5: #{tpu_custom_call.1} parent=1 // pred_fallthru
      _
    // Predicated region
    $region6: #{tpu_custom_call.1} parent=1 // pred_check
      _
    $region7: #{tpu_custom_call.1} parent=1 // pred_check_branch
      %24 = sbr.rel (0) target = $region9
    $region8: #{tpu_custom_call.1} parent=1 // pred_region
      %s26 = ssub.s32 512, 512
      %27 = vsyncadd [#allocation10], %s26
      %s28 = sshll.u32 [#allocation9], 4
      %s29 = int_to_ptr.vmem [resolvable:$true] %s28
      %34 = dma.hbm_to_vmem [thread:$0]  %s1, 512, %s29, [#allocation10], 64, 64, 4
    $region9: #{tpu_custom_call.1} parent=1 // pred_fallthru
      _
    // Predicated region
    $region10: #{tpu_custom_call.1} parent=1 // pred_check
      _
    $region11: #{tpu_custom_call.1} parent=1 // pred_check_branch
      %36 = sbr.rel (0) target = $region13
    $region12: #{tpu_custom_call.1} parent=1 // pred_region
      _
    $region13: #{tpu_custom_call.1} parent=1 // pred_fallthru
      _
    // Predicated region
    $region14: #{tpu_custom_call.1} parent=1 // pred_check
      _
    $region15: #{tpu_custom_call.1} parent=1 // pred_check_branch
      %38 = sbr.rel (0) target = $region17
    $region16: #{tpu_custom_call.1} parent=1 // pred_region
      %39 = dma.done [#allocation7], 128
    $region17: #{tpu_custom_call.1} parent=1 // pred_fallthru
      _
    // Predicated region
    $region18: #{tpu_custom_call.1} parent=1 // pred_check
      _
    $region19: #{tpu_custom_call.1} parent=1 // pred_check_branch
      %41 = sbr.rel (0) target = $region21
    $region20: #{tpu_custom_call.1} parent=1 // pred_region
      %42 = dma.done [#allocation10], 512
    $region21: #{tpu_custom_call.1} parent=1 // pred_fallthru
      _
    %p44 = scmp.eq.s32.totalorder 0, 0
    // Predicated region
    $region22: #{tpu_custom_call.1} parent=1 // pred_check
      %p45 = pneg %p44
    $region23: #{tpu_custom_call.1} parent=1 // pred_check_branch
      %47 = sbr.rel (%p45) target = $region25
    $region24: #{tpu_custom_call.1} parent=1 // pred_region
      %vm48 = vcmask 254976
      %49 = vst.msk [vmem:[#allocation2] sm:$0x3] %vm48, 0.0
      %50 = vst.msk [vmem:[#allocation3] sm:$0x3] %vm48, 0.0
      %51 = vst.msk [vmem:[#allocation4] sm:$0x3] %vm48, 0.0
      %52 = vst.msk [vmem:[#allocation5] sm:$0x3] %vm48, 0.0
    $region25: #{tpu_custom_call.1} parent=1 // pred_fallthru
      _
    %v53 = vld [vmem:[#allocation9] sm:$0xf]
    %v54 = vld [vmem:[#allocation9 + $0x4] sm:$0xf]
    %v55 = vld [vmem:[#allocation9 + $0x8] sm:$0xf]
    %v56 = vld [vmem:[#allocation9 + $0xc] sm:$0xf]
    %v57 = vld [vmem:[#allocation9 + $0x10] sm:$0xf]
    %v58 = vld [vmem:[#allocation9 + $0x14] sm:$0xf]
    %v59 = vld [vmem:[#allocation9 + $0x18] sm:$0xf]
    %v60 = vld [vmem:[#allocation9 + $0x1c] sm:$0xf]
    %v61 = vld [vmem:[%s2] sm:$0x1]
    %v63 = vlaneseq
    %v64 = vshrl.u32 %v63, 7
    %v65 = vsub.s32 0, %v64
    %v66 = vrot.slane %v61, %v65
    %v68 = vlaneseq
    %v69 = vand.u32 %v68, 127
    %vm70 = vcmp.ge.s32.totalorder %v69, 64
    %vm71 = vcmp.lt.s32.totalorder %v69, 96
    %vm72 = vmand %vm70, %vm71
    %v73 = vld [vmem:[#allocation2] sm:$0x3]
    %v74 = vld [vmem:[#allocation3] sm:$0x3]
    %v75 = vld [vmem:[#allocation4] sm:$0x3]
    %v76 = vld [vmem:[#allocation5] sm:$0x3]
    %v77 = vld [vmem:[#allocation6] sm:$0x1]
    %v78 = vpack.c.bf16 %v73, %v73
    %80 = vrot.lane.b32.xlu0 %v78, 32
    %v81 = vpop.permute.xlu0 %80
    %vm82 = vcmask 261120
    %v85 = vsel %vm82, %v77, %v81
    %v94 = vunpack.c.l.b16 %v53
    %v95 = vunpack.c.l.b16 %v54
    %v96 = vunpack.c.l.b16 %v55
    %v97 = vunpack.c.l.b16 %v56
    %v98 = vunpack.c.l.b16 %v57
    %v99 = vunpack.c.l.b16 %v58
    %v100 = vunpack.c.l.b16 %v59
    %v101 = vunpack.c.l.b16 %v60
    %v102 = vpack.c.b16 %v95, %v94
    %v103 = vpack.c.b16 %v97, %v96
    %v104 = vpack.c.b16 %v99, %v98
    %v105 = vpack.c.b16 %v101, %v100
    %vm110 = vcmask 523264
    %v111 = vsel %vm110, %v85, 0
    %113 = vmatprep.subr.bf16.mxu0 0
    %114 = vmatpush1.bf16.msra.mxu0 0
    %115 = vmatprep.subr.bf16.mxu0 0
    %116 = vmatpush1.bf16.msra.mxu0 0
    %117 = vmatprep.subr.bf16.mxu0 0
    %118 = vmatpush1.bf16.msra.mxu0 0
    %119 = vmatprep.subr.bf16.mxu0 0
    %120 = vmatpush1.bf16.msra.mxu0 0
    %121 = vmatprep.subr.bf16.mxu0 0
    %122 = vmatpush1.bf16.msra.mxu0 %v105
    %123 = vmatprep.subr.bf16.mxu0 0
    %124 = vmatpush1.bf16.msra.mxu0 %v104
    %125 = vmatprep.subr.bf16.mxu0 0
    %126 = vmatpush1.bf16.msra.mxu0 %v103
    %127 = vmatprep.subr.bf16.mxu0 0
    %128 = vmatpush1.bf16.msra.mxu0 %v102
    %129 = vmatprep.subr.bf16.mxu0 0
    %130 = vmatpush2.bf16.msra.mxu0 0
    %131 = vmatprep.subr.bf16.mxu0 0
    %132 = vmatpush2.bf16.msra.mxu0 0
    %133 = vmatprep.subr.bf16.mxu0 0
    %134 = vmatpush2.bf16.msra.mxu0 0
    %135 = vmatprep.subr.bf16.mxu0 0
    %136 = vmatpush2.bf16.msra.mxu0 0
    %137 = vmatprep.subr.bf16.mxu0 0
    %138 = vmatpush2.bf16.msra.mxu0 0
    %139 = vmatprep.subr.bf16.mxu0 0
    %140 = vmatpush2.bf16.msra.mxu0 0
    %141 = vmatprep.subr.bf16.mxu0 0
    %142 = vmatpush2.bf16.msra.mxu0 0
    %143 = vmatprep.subr.bf16.mxu0 0
    %144 = vmatpush2.bf16.msra.mxu0 0
    %145 = vmatprep.mubr.bf16.mxu0 0
    %146 = vmatmul.mubr.bf16.gmra.mxu0 %v111
    %v147 = vpop.f32.mrf.mxu0
    %v148 = vadd.f32 %v66, %v147
    %v149 = vpop.f32.mrf.mxu0
    %v150 = vpop.f32.mrf.mxu0
    %v151 = vpop.f32.mrf.mxu0
    %152 = vdwg.mxu0
    %v153 = vtanh.pop %v148
    %v154 = vxor.u32 %v148, 2147483648
    %v155 = vmul.f32 %v154, 1.442695
    %v156 = vpow.pop %v155
    %v157 = vadd.f32 %v156, 1.0
    %v158 = vrcp.pop %v157
    %v159 = vmul.f32 1.0, %v158
    %v160 = vsel %vm72, %v153, %v159
    %162 = vrot.lane.b32.xlu0 %v74, 32
    %v163 = vpop.permute.xlu0 %162
    %v165 = vmul.f32 %v160, %v163
    %167 = vrot.lane.b32.xlu0 %v160, 64
    %v168 = vpop.permute.xlu0 %167
    %v170 = vmul.f32 %v160, %v168
    %172 = vrot.lane.b32.xlu0 %v170, 32
    %v173 = vpop.permute.xlu0 %172
    %v175 = vadd.f32 %v165, %v173
    %v176 = vtanh.pop %v175
    %178 = vrot.lane.b32.xlu0 %v176, 64
    %v179 = vpop.permute.xlu0 %178
    %v181 = vmul.f32 %v160, %v179
    %v182 = vtanh.pop %v181
    %v183 = vpack.c.bf16 %v182, %v182
    %v184 = vpack.c.bf16 %v75, %v75
    %186 = vrot.lane.b32.xlu0 %v183, 32
    %v187 = vpop.permute.xlu0 %186
    %189 = vrot.lane.b32.xlu0 %v184, 32
    %v190 = vpop.permute.xlu0 %189
    %v193 = vsel %vm82, %v187, %v190
    %v194 = vsel %vm110, %v193, 0
    %196 = vmatprep.subr.bf16.mxu0 0
    %197 = vmatpush1.bf16.msra.mxu0 0
    %198 = vmatprep.subr.bf16.mxu0 0
    %199 = vmatpush1.bf16.msra.mxu0 0
    %200 = vmatprep.subr.bf16.mxu0 0
    %201 = vmatpush1.bf16.msra.mxu0 0
    %202 = vmatprep.subr.bf16.mxu0 0
    %203 = vmatpush1.bf16.msra.mxu0 0
    %204 = vmatprep.subr.bf16.mxu0 0
    %205 = vmatpush1.bf16.msra.mxu0 %v105
    %206 = vmatprep.subr.bf16.mxu0 0
    %207 = vmatpush1.bf16.msra.mxu0 %v104
    %208 = vmatprep.subr.bf16.mxu0 0
    %209 = vmatpush1.bf16.msra.mxu0 %v103
    %210 = vmatprep.subr.bf16.mxu0 0
    %211 = vmatpush1.bf16.msra.mxu0 %v102
    %212 = vmatprep.subr.bf16.mxu0 0
    %213 = vmatpush2.bf16.msra.mxu0 0
    %214 = vmatprep.subr.bf16.mxu0 0
    %215 = vmatpush2.bf16.msra.mxu0 0
    %216 = vmatprep.subr.bf16.mxu0 0
    %217 = vmatpush2.bf16.msra.mxu0 0
    %218 = vmatprep.subr.bf16.mxu0 0
    %219 = vmatpush2.bf16.msra.mxu0 0
    %220 = vmatprep.subr.bf16.mxu0 0
    %221 = vmatpush2.bf16.msra.mxu0 0
    %222 = vmatprep.subr.bf16.mxu0 0
    %223 = vmatpush2.bf16.msra.mxu0 0
    %224 = vmatprep.subr.bf16.mxu0 0
    %225 = vmatpush2.bf16.msra.mxu0 0
    %226 = vmatprep.subr.bf16.mxu0 0
    %227 = vmatpush2.bf16.msra.mxu0 0
    %228 = vmatprep.mubr.bf16.mxu0 0
    %229 = vmatmul.mubr.bf16.gmra.mxu0 %v194
    %v230 = vpop.f32.mrf.mxu0
    %v231 = vadd.f32 %v66, %v230
    %v232 = vpop.f32.mrf.mxu0
    %v233 = vpop.f32.mrf.mxu0
    %v234 = vpop.f32.mrf.mxu0
    %235 = vdwg.mxu0
    %v236 = vtanh.pop %v231
    %v237 = vxor.u32 %v231, 2147483648
    %v238 = vmul.f32 %v237, 1.442695
    %v239 = vpow.pop %v238
    %v240 = vadd.f32 %v239, 1.0
    %v241 = vrcp.pop %v240
    %v242 = vmul.f32 1.0, %v241
    %v243 = vsel %vm72, %v236, %v242
    %245 = vrot.lane.b32.xlu0 %v76, 32
    %v246 = vpop.permute.xlu0 %245
    %v248 = vmul.f32 %v243, %v246
    %250 = vrot.lane.b32.xlu0 %v243, 64
    %v251 = vpop.permute.xlu0 %250
    %v253 = vmul.f32 %v243, %v251
    %255 = vrot.lane.b32.xlu0 %v253, 32
    %v256 = vpop.permute.xlu0 %255
    %v258 = vadd.f32 %v248, %v256
    %v259 = vtanh.pop %v258
    %261 = vrot.lane.b32.xlu0 %v259, 64
    %v262 = vpop.permute.xlu0 %261
    %v264 = vmul.f32 %v243, %v262
    %266 = vrot.lane.b32.xlu0 %v264, 32
    %v267 = vpop.permute.xlu0 %266
    %vm269 = vcmask 254976
    %270 = vst.msk [vmem:[#allocation11] sm:$0x3] %vm269, %v267
    %s271 = scalar_lea.vmem [#allocation6], 1
    %v272 = vld [vmem:[%s271] sm:$0x1]
    %v273 = vpack.c.bf16 %v181, %v181
    %275 = vrot.lane.b32.xlu0 %v273, 64
    %v276 = vpop.permute.xlu0 %275
    %v279 = vsel %vm82, %v272, %v276
    %v280 = vsel %vm110, %v279, 0
    %282 = vmatprep.subr.bf16.mxu0 0
    %283 = vmatpush1.bf16.msra.mxu0 0
    %284 = vmatprep.subr.bf16.mxu0 0
    %285 = vmatpush1.bf16.msra.mxu0 0
    %286 = vmatprep.subr.bf16.mxu0 0
    %287 = vmatpush1.bf16.msra.mxu0 0
    %288 = vmatprep.subr.bf16.mxu0 0
    %289 = vmatpush1.bf16.msra.mxu0 0
    %290 = vmatprep.subr.bf16.mxu0 0
    %291 = vmatpush1.bf16.msra.mxu0 %v105
    %292 = vmatprep.subr.bf16.mxu0 0
    %293 = vmatpush1.bf16.msra.mxu0 %v104
    %294 = vmatprep.subr.bf16.mxu0 0
    %295 = vmatpush1.bf16.msra.mxu0 %v103
    %296 = vmatprep.subr.bf16.mxu0 0
    %297 = vmatpush1.bf16.msra.mxu0 %v102
    %298 = vmatprep.subr.bf16.mxu0 0
    %299 = vmatpush2.bf16.msra.mxu0 0
    %300 = vmatprep.subr.bf16.mxu0 0
    %301 = vmatpush2.bf16.msra.mxu0 0
    %302 = vmatprep.subr.bf16.mxu0 0
    %303 = vmatpush2.bf16.msra.mxu0 0
    %304 = vmatprep.subr.bf16.mxu0 0
    %305 = vmatpush2.bf16.msra.mxu0 0
    %306 = vmatprep.subr.bf16.mxu0 0
    %307 = vmatpush2.bf16.msra.mxu0 0
    %308 = vmatprep.subr.bf16.mxu0 0
    %309 = vmatpush2.bf16.msra.mxu0 0
    %310 = vmatprep.subr.bf16.mxu0 0
    %311 = vmatpush2.bf16.msra.mxu0 0
    %312 = vmatprep.subr.bf16.mxu0 0
    %313 = vmatpush2.bf16.msra.mxu0 0
    %314 = vmatprep.mubr.bf16.mxu0 0
    %315 = vmatmul.mubr.bf16.gmra.mxu0 %v280
    %v316 = vpop.f32.mrf.mxu0
    %v317 = vadd.f32 %v66, %v316
    %v318 = vpop.f32.mrf.mxu0
    %v319 = vpop.f32.mrf.mxu0
    %v320 = vpop.f32.mrf.mxu0
    %321 = vdwg.mxu0
    %v322 = vtanh.pop %v317
    %v323 = vxor.u32 %v317, 2147483648
    %v324 = vmul.f32 %v323, 1.442695
    %v325 = vpow.pop %v324
    %v326 = vadd.f32 %v325, 1.0
    %v327 = vrcp.pop %v326
    %v328 = vmul.f32 1.0, %v327
    %v329 = vsel %vm72, %v322, %v328
    %v330 = vmul.f32 %v329, %v175
    %332 = vrot.lane.b32.xlu0 %v329, 64
    %v333 = vpop.permute.xlu0 %332
    %v335 = vmul.f32 %v329, %v333
    %337 = vrot.lane.b32.xlu0 %v335, 32
    %v338 = vpop.permute.xlu0 %337
    %v340 = vadd.f32 %v330, %v338
    %v341 = vtanh.pop %v340
    %343 = vrot.lane.b32.xlu0 %v341, 64
    %v344 = vpop.permute.xlu0 %343
    %v346 = vmul.f32 %v329, %v344
    %v347 = vtanh.pop %v346
    %v348 = vpack.c.bf16 %v347, %v347
    %v349 = vpack.c.bf16 %v264, %v264
    %351 = vrot.lane.b32.xlu0 %v348, 32
    %v352 = vpop.permute.xlu0 %351
    %354 = vrot.lane.b32.xlu0 %v349, 64
    %v355 = vpop.permute.xlu0 %354
    %v358 = vsel %vm82, %v352, %v355
    %v359 = vsel %vm110, %v358, 0
    %361 = vmatprep.subr.bf16.mxu0 0
    %362 = vmatpush1.bf16.msra.mxu0 0
    %363 = vmatprep.subr.bf16.mxu0 0
    %364 = vmatpush1.bf16.msra.mxu0 0
    %365 = vmatprep.subr.bf16.mxu0 0
    %366 = vmatpush1.bf16.msra.mxu0 0
    %367 = vmatprep.subr.bf16.mxu0 0
    %368 = vmatpush1.bf16.msra.mxu0 0
    %369 = vmatprep.subr.bf16.mxu0 0
    %370 = vmatpush1.bf16.msra.mxu0 %v105
    %371 = vmatprep.subr.bf16.mxu0 0
    %372 = vmatpush1.bf16.msra.mxu0 %v104
    %373 = vmatprep.subr.bf16.mxu0 0
    %374 = vmatpush1.bf16.msra.mxu0 %v103
    %375 = vmatprep.subr.bf16.mxu0 0
    %376 = vmatpush1.bf16.msra.mxu0 %v102
    %377 = vmatprep.subr.bf16.mxu0 0
    %378 = vmatpush2.bf16.msra.mxu0 0
    %379 = vmatprep.subr.bf16.mxu0 0
    %380 = vmatpush2.bf16.msra.mxu0 0
    %381 = vmatprep.subr.bf16.mxu0 0
    %382 = vmatpush2.bf16.msra.mxu0 0
    %383 = vmatprep.subr.bf16.mxu0 0
    %384 = vmatpush2.bf16.msra.mxu0 0
    %385 = vmatprep.subr.bf16.mxu0 0
    %386 = vmatpush2.bf16.msra.mxu0 0
    %387 = vmatprep.subr.bf16.mxu0 0
    %388 = vmatpush2.bf16.msra.mxu0 0
    %389 = vmatprep.subr.bf16.mxu0 0
    %390 = vmatpush2.bf16.msra.mxu0 0
    %391 = vmatprep.subr.bf16.mxu0 0
    %392 = vmatpush2.bf16.msra.mxu0 0
    %393 = vmatprep.mubr.bf16.mxu0 0
    %394 = vmatmul.mubr.bf16.gmra.mxu0 %v359
    %v395 = vpop.f32.mrf.mxu0
    %v396 = vadd.f32 %v66, %v395
    %v397 = vpop.f32.mrf.mxu0
    %v398 = vpop.f32.mrf.mxu0
    %v399 = vpop.f32.mrf.mxu0
    %400 = vdwg.mxu0
    %v401 = vtanh.pop %v396
    %v402 = vxor.u32 %v396, 2147483648
    %v403 = vmul.f32 %v402, 1.442695
    %v404 = vpow.pop %v403
    %v405 = vadd.f32 %v404, 1.0
    %v406 = vrcp.pop %v405
    %v407 = vmul.f32 1.0, %v406
    %v408 = vsel %vm72, %v401, %v407
    %v409 = vmul.f32 %v408, %v258
    %411 = vrot.lane.b32.xlu0 %v408, 64
    %v412 = vpop.permute.xlu0 %411
    %v414 = vmul.f32 %v408, %v412
    %416 = vrot.lane.b32.xlu0 %v414, 32
    %v417 = vpop.permute.xlu0 %416
    %v419 = vadd.f32 %v409, %v417
    %v420 = vtanh.pop %v419
    %422 = vrot.lane.b32.xlu0 %v420, 64
    %v423 = vpop.permute.xlu0 %422
    %v425 = vmul.f32 %v408, %v423
    %427 = vrot.lane.b32.xlu0 %v425, 32
    %v428 = vpop.permute.xlu0 %427
    %s430 = scalar_lea.vmem [#allocation11], 2
    %431 = vst.msk [vmem:[%s430] sm:$0x3] %vm269, %v428
    %s432 = scalar_lea.vmem [#allocation6], 2
    %v433 = vld [vmem:[%s432] sm:$0x1]
    %v434 = vpack.c.bf16 %v346, %v346
    %436 = vrot.lane.b32.xlu0 %v434, 64
    %v437 = vpop.permute.xlu0 %436
    %v440 = vsel %vm82, %v433, %v437
    %v441 = vsel %vm110, %v440, 0
    %443 = vmatprep.subr.bf16.mxu0 0
    %444 = vmatpush1.bf16.msra.mxu0 0
    %445 = vmatprep.subr.bf16.mxu0 0
    %446 = vmatpush1.bf16.msra.mxu0 0
    %447 = vmatprep.subr.bf16.mxu0 0
    %448 = vmatpush1.bf16.msra.mxu0 0
    %449 = vmatprep.subr.bf16.mxu0 0
    %450 = vmatpush1.bf16.msra.mxu0 0
    %451 = vmatprep.subr.bf16.mxu0 0
    %452 = vmatpush1.bf16.msra.mxu0 %v105
    %453 = vmatprep.subr.bf16.mxu0 0
    %454 = vmatpush1.bf16.msra.mxu0 %v104
    %455 = vmatprep.subr.bf16.mxu0 0
    %456 = vmatpush1.bf16.msra.mxu0 %v103
    %457 = vmatprep.subr.bf16.mxu0 0
    %458 = vmatpush1.bf16.msra.mxu0 %v102
    %459 = vmatprep.subr.bf16.mxu0 0
    %460 = vmatpush2.bf16.msra.mxu0 0
    %461 = vmatprep.subr.bf16.mxu0 0
    %462 = vmatpush2.bf16.msra.mxu0 0
    %463 = vmatprep.subr.bf16.mxu0 0
    %464 = vmatpush2.bf16.msra.mxu0 0
    %465 = vmatprep.subr.bf16.mxu0 0
    %466 = vmatpush2.bf16.msra.mxu0 0
    %467 = vmatprep.subr.bf16.mxu0 0
    %468 = vmatpush2.bf16.msra.mxu0 0
    %469 = vmatprep.subr.bf16.mxu0 0
    %470 = vmatpush2.bf16.msra.mxu0 0
    %471 = vmatprep.subr.bf16.mxu0 0
    %472 = vmatpush2.bf16.msra.mxu0 0
    %473 = vmatprep.subr.bf16.mxu0 0
    %474 = vmatpush2.bf16.msra.mxu0 0
    %475 = vmatprep.mubr.bf16.mxu0 0
    %476 = vmatmul.mubr.bf16.gmra.mxu0 %v441
    %v477 = vpop.f32.mrf.mxu0
    %v478 = vadd.f32 %v66, %v477
    %v479 = vpop.f32.mrf.mxu0
    %v480 = vpop.f32.mrf.mxu0
    %v481 = vpop.f32.mrf.mxu0
    %482 = vdwg.mxu0
    %v483 = vtanh.pop %v478
    %v484 = vxor.u32 %v478, 2147483648
    %v485 = vmul.f32 %v484, 1.442695
    %v486 = vpow.pop %v485
    %v487 = vadd.f32 %v486, 1.0
    %v488 = vrcp.pop %v487
    %v489 = vmul.f32 1.0, %v488
    %v490 = vsel %vm72, %v483, %v489
    %v491 = vmul.f32 %v490, %v340
    %493 = vrot.lane.b32.xlu0 %v490, 64
    %v494 = vpop.permute.xlu0 %493
    %v496 = vmul.f32 %v490, %v494
    %498 = vrot.lane.b32.xlu0 %v496, 32
    %v499 = vpop.permute.xlu0 %498
    %v501 = vadd.f32 %v491, %v499
    %v502 = vtanh.pop %v501
    %504 = vrot.lane.b32.xlu0 %v502, 64
    %v505 = vpop.permute.xlu0 %504
    %v507 = vmul.f32 %v490, %v505
    %v508 = vtanh.pop %v507
    %v509 = vpack.c.bf16 %v508, %v508
    %v510 = vpack.c.bf16 %v425, %v425
    %512 = vrot.lane.b32.xlu0 %v509, 32
    %v513 = vpop.permute.xlu0 %512
    %515 = vrot.lane.b32.xlu0 %v510, 64
    %v516 = vpop.permute.xlu0 %515
    %v519 = vsel %vm82, %v513, %v516
    %v520 = vsel %vm110, %v519, 0
    %522 = vmatprep.subr.bf16.mxu0 0
    %523 = vmatpush1.bf16.msra.mxu0 0
    %524 = vmatprep.subr.bf16.mxu0 0
    %525 = vmatpush1.bf16.msra.mxu0 0
    %526 = vmatprep.subr.bf16.mxu0 0
    %527 = vmatpush1.bf16.msra.mxu0 0
    %528 = vmatprep.subr.bf16.mxu0 0
    %529 = vmatpush1.bf16.msra.mxu0 0
    %530 = vmatprep.subr.bf16.mxu0 0
    %531 = vmatpush1.bf16.msra.mxu0 %v105
    %532 = vmatprep.subr.bf16.mxu0 0
    %533 = vmatpush1.bf16.msra.mxu0 %v104
    %534 = vmatprep.subr.bf16.mxu0 0
    %535 = vmatpush1.bf16.msra.mxu0 %v103
    %536 = vmatprep.subr.bf16.mxu0 0
    %537 = vmatpush1.bf16.msra.mxu0 %v102
    %538 = vmatprep.subr.bf16.mxu0 0
    %539 = vmatpush2.bf16.msra.mxu0 0
    %540 = vmatprep.subr.bf16.mxu0 0
    %541 = vmatpush2.bf16.msra.mxu0 0
    %542 = vmatprep.subr.bf16.mxu0 0
    %543 = vmatpush2.bf16.msra.mxu0 0
    %544 = vmatprep.subr.bf16.mxu0 0
    %545 = vmatpush2.bf16.msra.mxu0 0
    %546 = vmatprep.subr.bf16.mxu0 0
    %547 = vmatpush2.bf16.msra.mxu0 0
    %548 = vmatprep.subr.bf16.mxu0 0
    %549 = vmatpush2.bf16.msra.mxu0 0
    %550 = vmatprep.subr.bf16.mxu0 0
    %551 = vmatpush2.bf16.msra.mxu0 0
    %552 = vmatprep.subr.bf16.mxu0 0
    %553 = vmatpush2.bf16.msra.mxu0 0
    %554 = vmatprep.mubr.bf16.mxu0 0
    %555 = vmatmul.mubr.bf16.gmra.mxu0 %v520
    %v556 = vpop.f32.mrf.mxu0
    %v557 = vadd.f32 %v66, %v556
    %v558 = vpop.f32.mrf.mxu0
    %v559 = vpop.f32.mrf.mxu0
    %v560 = vpop.f32.mrf.mxu0
    %561 = vdwg.mxu0
    %v562 = vtanh.pop %v557
    %v563 = vxor.u32 %v557, 2147483648
    %v564 = vmul.f32 %v563, 1.442695
    %v565 = vpow.pop %v564
    %v566 = vadd.f32 %v565, 1.0
    %v567 = vrcp.pop %v566
    %v568 = vmul.f32 1.0, %v567
    %v569 = vsel %vm72, %v562, %v568
    %v570 = vmul.f32 %v569, %v419
    %572 = vrot.lane.b32.xlu0 %v569, 64
    %v573 = vpop.permute.xlu0 %572
    %v575 = vmul.f32 %v569, %v573
    %577 = vrot.lane.b32.xlu0 %v575, 32
    %v578 = vpop.permute.xlu0 %577
    %v580 = vadd.f32 %v570, %v578
    %v581 = vtanh.pop %v580
    %583 = vrot.lane.b32.xlu0 %v581, 64
    %v584 = vpop.permute.xlu0 %583
    %v586 = vmul.f32 %v569, %v584
    %588 = vrot.lane.b32.xlu0 %v586, 32
    %v589 = vpop.permute.xlu0 %588
    %s591 = scalar_lea.vmem [#allocation11], 4
    %592 = vst.msk [vmem:[%s591] sm:$0x3] %vm269, %v589
    %s593 = scalar_lea.vmem [#allocation6], 3
    %v594 = vld [vmem:[%s593] sm:$0x1]
    %v595 = vpack.c.bf16 %v507, %v507
    %597 = vrot.lane.b32.xlu0 %v595, 64
    %v598 = vpop.permute.xlu0 %597
    %v601 = vsel %vm82, %v594, %v598
    %v602 = vsel %vm110, %v601, 0
    %604 = vmatprep.subr.bf16.mxu0 0
    %605 = vmatpush1.bf16.msra.mxu0 0
    %606 = vmatprep.subr.bf16.mxu0 0
    %607 = vmatpush1.bf16.msra.mxu0 0
    %608 = vmatprep.subr.bf16.mxu0 0
    %609 = vmatpush1.bf16.msra.mxu0 0
    %610 = vmatprep.subr.bf16.mxu0 0
    %611 = vmatpush1.bf16.msra.mxu0 0
    %612 = vmatprep.subr.bf16.mxu0 0
    %613 = vmatpush1.bf16.msra.mxu0 %v105
    %614 = vmatprep.subr.bf16.mxu0 0
    %615 = vmatpush1.bf16.msra.mxu0 %v104
    %616 = vmatprep.subr.bf16.mxu0 0
    %617 = vmatpush1.bf16.msra.mxu0 %v103
    %618 = vmatprep.subr.bf16.mxu0 0
    %619 = vmatpush1.bf16.msra.mxu0 %v102
    %620 = vmatprep.subr.bf16.mxu0 0
    %621 = vmatpush2.bf16.msra.mxu0 0
    %622 = vmatprep.subr.bf16.mxu0 0
    %623 = vmatpush2.bf16.msra.mxu0 0
    %624 = vmatprep.subr.bf16.mxu0 0
    %625 = vmatpush2.bf16.msra.mxu0 0
    %626 = vmatprep.subr.bf16.mxu0 0
    %627 = vmatpush2.bf16.msra.mxu0 0
    %628 = vmatprep.subr.bf16.mxu0 0
    %629 = vmatpush2.bf16.msra.mxu0 0
    %630 = vmatprep.subr.bf16.mxu0 0
    %631 = vmatpush2.bf16.msra.mxu0 0
    %632 = vmatprep.subr.bf16.mxu0 0
    %633 = vmatpush2.bf16.msra.mxu0 0
    %634 = vmatprep.subr.bf16.mxu0 0
    %635 = vmatpush2.bf16.msra.mxu0 0
    %636 = vmatprep.mubr.bf16.mxu0 0
    %637 = vmatmul.mubr.bf16.gmra.mxu0 %v602
    %v638 = vpop.f32.mrf.mxu0
    %v639 = vadd.f32 %v66, %v638
    %v640 = vpop.f32.mrf.mxu0
    %v641 = vpop.f32.mrf.mxu0
    %v642 = vpop.f32.mrf.mxu0
    %643 = vdwg.mxu0
    %v644 = vtanh.pop %v639
    %v645 = vxor.u32 %v639, 2147483648
    %v646 = vmul.f32 %v645, 1.442695
    %v647 = vpow.pop %v646
    %v648 = vadd.f32 %v647, 1.0
    %v649 = vrcp.pop %v648
    %v650 = vmul.f32 1.0, %v649
    %v651 = vsel %vm72, %v644, %v650
    %v652 = vmul.f32 %v651, %v501
    %654 = vrot.lane.b32.xlu0 %v651, 64
    %v655 = vpop.permute.xlu0 %654
    %v657 = vmul.f32 %v651, %v655
    %659 = vrot.lane.b32.xlu0 %v657, 32
    %v660 = vpop.permute.xlu0 %659
    %v662 = vadd.f32 %v652, %v660
    %v663 = vtanh.pop %v662
    %665 = vrot.lane.b32.xlu0 %v663, 64
    %v666 = vpop.permute.xlu0 %665
    %v668 = vmul.f32 %v651, %v666
    %v669 = vtanh.pop %v668
    %v670 = vpack.c.bf16 %v669, %v669
    %v671 = vpack.c.bf16 %v586, %v586
    %673 = vrot.lane.b32.xlu0 %v670, 32
    %v674 = vpop.permute.xlu0 %673
    %676 = vrot.lane.b32.xlu0 %v671, 64
    %v677 = vpop.permute.xlu0 %676
    %v680 = vsel %vm82, %v674, %v677
    %v681 = vsel %vm110, %v680, 0
    %683 = vmatprep.subr.bf16.mxu0 0
    %684 = vmatpush1.bf16.msra.mxu0 0
    %685 = vmatprep.subr.bf16.mxu0 0
    %686 = vmatpush1.bf16.msra.mxu0 0
    %687 = vmatprep.subr.bf16.mxu0 0
    %688 = vmatpush1.bf16.msra.mxu0 0
    %689 = vmatprep.subr.bf16.mxu0 0
    %690 = vmatpush1.bf16.msra.mxu0 0
    %691 = vmatprep.subr.bf16.mxu0 0
    %692 = vmatpush1.bf16.msra.mxu0 %v105
    %693 = vmatprep.subr.bf16.mxu0 0
    %694 = vmatpush1.bf16.msra.mxu0 %v104
    %695 = vmatprep.subr.bf16.mxu0 0
    %696 = vmatpush1.bf16.msra.mxu0 %v103
    %697 = vmatprep.subr.bf16.mxu0 0
    %698 = vmatpush1.bf16.msra.mxu0 %v102
    %699 = vmatprep.subr.bf16.mxu0 0
    %700 = vmatpush2.bf16.msra.mxu0 0
    %701 = vmatprep.subr.bf16.mxu0 0
    %702 = vmatpush2.bf16.msra.mxu0 0
    %703 = vmatprep.subr.bf16.mxu0 0
    %704 = vmatpush2.bf16.msra.mxu0 0
    %705 = vmatprep.subr.bf16.mxu0 0
    %706 = vmatpush2.bf16.msra.mxu0 0
    %707 = vmatprep.subr.bf16.mxu0 0
    %708 = vmatpush2.bf16.msra.mxu0 0
    %709 = vmatprep.subr.bf16.mxu0 0
    %710 = vmatpush2.bf16.msra.mxu0 0
    %711 = vmatprep.subr.bf16.mxu0 0
    %712 = vmatpush2.bf16.msra.mxu0 0
    %713 = vmatprep.subr.bf16.mxu0 0
    %714 = vmatpush2.bf16.msra.mxu0 0
    %715 = vmatprep.mubr.bf16.mxu0 0
    %716 = vmatmul.mubr.bf16.gmra.mxu0 %v681
    %v717 = vpop.f32.mrf.mxu0
    %v718 = vadd.f32 %v66, %v717
    %v719 = vpop.f32.mrf.mxu0
    %v720 = vpop.f32.mrf.mxu0
    %v721 = vpop.f32.mrf.mxu0
    %722 = vdwg.mxu0
    %v723 = vtanh.pop %v718
    %v724 = vxor.u32 %v718, 2147483648
    %v725 = vmul.f32 %v724, 1.442695
    %v726 = vpow.pop %v725
    %v727 = vadd.f32 %v726, 1.0
    %v728 = vrcp.pop %v727
    %v729 = vmul.f32 1.0, %v728
    %v730 = vsel %vm72, %v723, %v729
    %v731 = vmul.f32 %v730, %v580
    %733 = vrot.lane.b32.xlu0 %v730, 64
    %v734 = vpop.permute.xlu0 %733
    %v736 = vmul.f32 %v730, %v734
    %738 = vrot.lane.b32.xlu0 %v736, 32
    %v739 = vpop.permute.xlu0 %738
    %v741 = vadd.f32 %v731, %v739
    %v742 = vtanh.pop %v741
    %744 = vrot.lane.b32.xlu0 %v742, 64
    %v745 = vpop.permute.xlu0 %744
    %v747 = vmul.f32 %v730, %v745
    %749 = vrot.lane.b32.xlu0 %v747, 32
    %v750 = vpop.permute.xlu0 %749
    %s752 = scalar_lea.vmem [#allocation11], 6
    %753 = vst.msk [vmem:[%s752] sm:$0x3] %vm269, %v750
    %s754 = scalar_lea.vmem [#allocation6], 4
    %v755 = vld [vmem:[%s754] sm:$0x1]
    %v756 = vpack.c.bf16 %v668, %v668
    %758 = vrot.lane.b32.xlu0 %v756, 64
    %v759 = vpop.permute.xlu0 %758
    %v762 = vsel %vm82, %v755, %v759
    %v763 = vsel %vm110, %v762, 0
    %765 = vmatprep.subr.bf16.mxu0 0
    %766 = vmatpush1.bf16.msra.mxu0 0
    %767 = vmatprep.subr.bf16.mxu0 0
    %768 = vmatpush1.bf16.msra.mxu0 0
    %769 = vmatprep.subr.bf16.mxu0 0
    %770 = vmatpush1.bf16.msra.mxu0 0
    %771 = vmatprep.subr.bf16.mxu0 0
    %772 = vmatpush1.bf16.msra.mxu0 0
    %773 = vmatprep.subr.bf16.mxu0 0
    %774 = vmatpush1.bf16.msra.mxu0 %v105
    %775 = vmatprep.subr.bf16.mxu0 0
    %776 = vmatpush1.bf16.msra.mxu0 %v104
    %777 = vmatprep.subr.bf16.mxu0 0
    %778 = vmatpush1.bf16.msra.mxu0 %v103
    %779 = vmatprep.subr.bf16.mxu0 0
    %780 = vmatpush1.bf16.msra.mxu0 %v102
    %781 = vmatprep.subr.bf16.mxu0 0
    %782 = vmatpush2.bf16.msra.mxu0 0
    %783 = vmatprep.subr.bf16.mxu0 0
    %784 = vmatpush2.bf16.msra.mxu0 0
    %785 = vmatprep.subr.bf16.mxu0 0
    %786 = vmatpush2.bf16.msra.mxu0 0
    %787 = vmatprep.subr.bf16.mxu0 0
    %788 = vmatpush2.bf16.msra.mxu0 0
    %789 = vmatprep.subr.bf16.mxu0 0
    %790 = vmatpush2.bf16.msra.mxu0 0
    %791 = vmatprep.subr.bf16.mxu0 0
    %792 = vmatpush2.bf16.msra.mxu0 0
    %793 = vmatprep.subr.bf16.mxu0 0
    %794 = vmatpush2.bf16.msra.mxu0 0
    %795 = vmatprep.subr.bf16.mxu0 0
    %796 = vmatpush2.bf16.msra.mxu0 0
    %797 = vmatprep.mubr.bf16.mxu0 0
    %798 = vmatmul.mubr.bf16.gmra.mxu0 %v763
    %v799 = vpop.f32.mrf.mxu0
    %v800 = vadd.f32 %v66, %v799
    %v801 = vpop.f32.mrf.mxu0
    %v802 = vpop.f32.mrf.mxu0
    %v803 = vpop.f32.mrf.mxu0
    %804 = vdwg.mxu0
    %v805 = vtanh.pop %v800
    %v806 = vxor.u32 %v800, 2147483648
    %v807 = vmul.f32 %v806, 1.442695
    %v808 = vpow.pop %v807
    %v809 = vadd.f32 %v808, 1.0
    %v810 = vrcp.pop %v809
    %v811 = vmul.f32 1.0, %v810
    %v812 = vsel %vm72, %v805, %v811
    %v813 = vmul.f32 %v812, %v662
    %815 = vrot.lane.b32.xlu0 %v812, 64
    %v816 = vpop.permute.xlu0 %815
    %v818 = vmul.f32 %v812, %v816
    %820 = vrot.lane.b32.xlu0 %v818, 32
    %v821 = vpop.permute.xlu0 %820
    %v823 = vadd.f32 %v813, %v821
    %v824 = vtanh.pop %v823
    %826 = vrot.lane.b32.xlu0 %v824, 64
    %v827 = vpop.permute.xlu0 %826
    %v829 = vmul.f32 %v812, %v827
    %v830 = vtanh.pop %v829
    %v831 = vpack.c.bf16 %v830, %v830
    %v832 = vpack.c.bf16 %v747, %v747
    %834 = vrot.lane.b32.xlu0 %v831, 32
    %v835 = vpop.permute.xlu0 %834
    %837 = vrot.lane.b32.xlu0 %v832, 64
    %v838 = vpop.permute.xlu0 %837
    %v841 = vsel %vm82, %v835, %v838
    %v842 = vsel %vm110, %v841, 0
    %844 = vmatprep.subr.bf16.mxu0 0
    %845 = vmatpush1.bf16.msra.mxu0 0
    %846 = vmatprep.subr.bf16.mxu0 0
    %847 = vmatpush1.bf16.msra.mxu0 0
    %848 = vmatprep.subr.bf16.mxu0 0
    %849 = vmatpush1.bf16.msra.mxu0 0
    %850 = vmatprep.subr.bf16.mxu0 0
    %851 = vmatpush1.bf16.msra.mxu0 0
    %852 = vmatprep.subr.bf16.mxu0 0
    %853 = vmatpush1.bf16.msra.mxu0 %v105
    %854 = vmatprep.subr.bf16.mxu0 0
    %855 = vmatpush1.bf16.msra.mxu0 %v104
    %856 = vmatprep.subr.bf16.mxu0 0
    %857 = vmatpush1.bf16.msra.mxu0 %v103
    %858 = vmatprep.subr.bf16.mxu0 0
    %859 = vmatpush1.bf16.msra.mxu0 %v102
    %860 = vmatprep.subr.bf16.mxu0 0
    %861 = vmatpush2.bf16.msra.mxu0 0
    %862 = vmatprep.subr.bf16.mxu0 0
    %863 = vmatpush2.bf16.msra.mxu0 0
    %864 = vmatprep.subr.bf16.mxu0 0
    %865 = vmatpush2.bf16.msra.mxu0 0
    %866 = vmatprep.subr.bf16.mxu0 0
    %867 = vmatpush2.bf16.msra.mxu0 0
    %868 = vmatprep.subr.bf16.mxu0 0
    %869 = vmatpush2.bf16.msra.mxu0 0
    %870 = vmatprep.subr.bf16.mxu0 0
    %871 = vmatpush2.bf16.msra.mxu0 0
    %872 = vmatprep.subr.bf16.mxu0 0
    %873 = vmatpush2.bf16.msra.mxu0 0
    %874 = vmatprep.subr.bf16.mxu0 0
    %875 = vmatpush2.bf16.msra.mxu0 0
    %876 = vmatprep.mubr.bf16.mxu0 0
    %877 = vmatmul.mubr.bf16.gmra.mxu0 %v842
    %v878 = vpop.f32.mrf.mxu0
    %v879 = vadd.f32 %v66, %v878
    %v880 = vpop.f32.mrf.mxu0
    %v881 = vpop.f32.mrf.mxu0
    %v882 = vpop.f32.mrf.mxu0
    %883 = vdwg.mxu0
    %v884 = vtanh.pop %v879
    %v885 = vxor.u32 %v879, 2147483648
    %v886 = vmul.f32 %v885, 1.442695
    %v887 = vpow.pop %v886
    %v888 = vadd.f32 %v887, 1.0
    %v889 = vrcp.pop %v888
    %v890 = vmul.f32 1.0, %v889
    %v891 = vsel %vm72, %v884, %v890
    %v892 = vmul.f32 %v891, %v741
    %894 = vrot.lane.b32.xlu0 %v891, 64
    %v895 = vpop.permute.xlu0 %894
    %v897 = vmul.f32 %v891, %v895
    %899 = vrot.lane.b32.xlu0 %v897, 32
    %v900 = vpop.permute.xlu0 %899
    %v902 = vadd.f32 %v892, %v900
    %v903 = vtanh.pop %v902
    %905 = vrot.lane.b32.xlu0 %v903, 64
    %v906 = vpop.permute.xlu0 %905
    %v908 = vmul.f32 %v891, %v906
    %910 = vrot.lane.b32.xlu0 %v908, 32
    %v911 = vpop.permute.xlu0 %910
    %s913 = scalar_lea.vmem [#allocation11], 8
    %914 = vst.msk [vmem:[%s913] sm:$0x3] %vm269, %v911
    %s915 = scalar_lea.vmem [#allocation6], 5
    %v916 = vld [vmem:[%s915] sm:$0x1]
    %v917 = vpack.c.bf16 %v829, %v829
    %919 = vrot.lane.b32.xlu0 %v917, 64
    %v920 = vpop.permute.xlu0 %919
    %v923 = vsel %vm82, %v916, %v920
    %v924 = vsel %vm110, %v923, 0
    %926 = vmatprep.subr.bf16.mxu0 0
    %927 = vmatpush1.bf16.msra.mxu0 0
    %928 = vmatprep.subr.bf16.mxu0 0
    %929 = vmatpush1.bf16.msra.mxu0 0
    %930 = vmatprep.subr.bf16.mxu0 0
    %931 = vmatpush1.bf16.msra.mxu0 0
    %932 = vmatprep.subr.bf16.mxu0 0
    %933 = vmatpush1.bf16.msra.mxu0 0
    %934 = vmatprep.subr.bf16.mxu0 0
    %935 = vmatpush1.bf16.msra.mxu0 %v105
    %936 = vmatprep.subr.bf16.mxu0 0
    %937 = vmatpush1.bf16.msra.mxu0 %v104
    %938 = vmatprep.subr.bf16.mxu0 0
    %939 = vmatpush1.bf16.msra.mxu0 %v103
    %940 = vmatprep.subr.bf16.mxu0 0
    %941 = vmatpush1.bf16.msra.mxu0 %v102
    %942 = vmatprep.subr.bf16.mxu0 0
    %943 = vmatpush2.bf16.msra.mxu0 0
    %944 = vmatprep.subr.bf16.mxu0 0
    %945 = vmatpush2.bf16.msra.mxu0 0
    %946 = vmatprep.subr.bf16.mxu0 0
    %947 = vmatpush2.bf16.msra.mxu0 0
    %948 = vmatprep.subr.bf16.mxu0 0
    %949 = vmatpush2.bf16.msra.mxu0 0
    %950 = vmatprep.subr.bf16.mxu0 0
    %951 = vmatpush2.bf16.msra.mxu0 0
    %952 = vmatprep.subr.bf16.mxu0 0
    %953 = vmatpush2.bf16.msra.mxu0 0
    %954 = vmatprep.subr.bf16.mxu0 0
    %955 = vmatpush2.bf16.msra.mxu0 0
    %956 = vmatprep.subr.bf16.mxu0 0
    %957 = vmatpush2.bf16.msra.mxu0 0
    %958 = vmatprep.mubr.bf16.mxu0 0
    %959 = vmatmul.mubr.bf16.gmra.mxu0 %v924
    %v960 = vpop.f32.mrf.mxu0
    %v961 = vadd.f32 %v66, %v960
    %v962 = vpop.f32.mrf.mxu0
    %v963 = vpop.f32.mrf.mxu0
    %v964 = vpop.f32.mrf.mxu0
    %965 = vdwg.mxu0
    %v966 = vtanh.pop %v961
    %v967 = vxor.u32 %v961, 2147483648
    %v968 = vmul.f32 %v967, 1.442695
    %v969 = vpow.pop %v968
    %v970 = vadd.f32 %v969, 1.0
    %v971 = vrcp.pop %v970
    %v972 = vmul.f32 1.0, %v971
    %v973 = vsel %vm72, %v966, %v972
    %v974 = vmul.f32 %v973, %v823
    %976 = vrot.lane.b32.xlu0 %v973, 64
    %v977 = vpop.permute.xlu0 %976
    %v979 = vmul.f32 %v973, %v977
    %981 = vrot.lane.b32.xlu0 %v979, 32
    %v982 = vpop.permute.xlu0 %981
    %v984 = vadd.f32 %v974, %v982
    %v985 = vtanh.pop %v984
    %987 = vrot.lane.b32.xlu0 %v985, 64
    %v988 = vpop.permute.xlu0 %987
    %v990 = vmul.f32 %v973, %v988
    %v991 = vtanh.pop %v990
    %v992 = vpack.c.bf16 %v991, %v991
    %v993 = vpack.c.bf16 %v908, %v908
    %995 = vrot.lane.b32.xlu0 %v992, 32
    %v996 = vpop.permute.xlu0 %995
    %998 = vrot.lane.b32.xlu0 %v993, 64
    %v999 = vpop.permute.xlu0 %998
    %v1002 = vsel %vm82, %v996, %v999
    %v1003 = vsel %vm110, %v1002, 0
    %1005 = vmatprep.subr.bf16.mxu0 0
    %1006 = vmatpush1.bf16.msra.mxu0 0
    %1007 = vmatprep.subr.bf16.mxu0 0
    %1008 = vmatpush1.bf16.msra.mxu0 0
    %1009 = vmatprep.subr.bf16.mxu0 0
    %1010 = vmatpush1.bf16.msra.mxu0 0
    %1011 = vmatprep.subr.bf16.mxu0 0
    %1012 = vmatpush1.bf16.msra.mxu0 0
    %1013 = vmatprep.subr.bf16.mxu0 0
    %1014 = vmatpush1.bf16.msra.mxu0 %v105
    %1015 = vmatprep.subr.bf16.mxu0 0
    %1016 = vmatpush1.bf16.msra.mxu0 %v104
    %1017 = vmatprep.subr.bf16.mxu0 0
    %1018 = vmatpush1.bf16.msra.mxu0 %v103
    %1019 = vmatprep.subr.bf16.mxu0 0
    %1020 = vmatpush1.bf16.msra.mxu0 %v102
    %1021 = vmatprep.subr.bf16.mxu0 0
    %1022 = vmatpush2.bf16.msra.mxu0 0
    %1023 = vmatprep.subr.bf16.mxu0 0
    %1024 = vmatpush2.bf16.msra.mxu0 0
    %1025 = vmatprep.subr.bf16.mxu0 0
    %1026 = vmatpush2.bf16.msra.mxu0 0
    %1027 = vmatprep.subr.bf16.mxu0 0
    %1028 = vmatpush2.bf16.msra.mxu0 0
    %1029 = vmatprep.subr.bf16.mxu0 0
    %1030 = vmatpush2.bf16.msra.mxu0 0
    %1031 = vmatprep.subr.bf16.mxu0 0
    %1032 = vmatpush2.bf16.msra.mxu0 0
    %1033 = vmatprep.subr.bf16.mxu0 0
    %1034 = vmatpush2.bf16.msra.mxu0 0
    %1035 = vmatprep.subr.bf16.mxu0 0
    %1036 = vmatpush2.bf16.msra.mxu0 0
    %1037 = vmatprep.mubr.bf16.mxu0 0
    %1038 = vmatmul.mubr.bf16.gmra.mxu0 %v1003
    %v1039 = vpop.f32.mrf.mxu0
    %v1040 = vadd.f32 %v66, %v1039
    %v1041 = vpop.f32.mrf.mxu0
    %v1042 = vpop.f32.mrf.mxu0
    %v1043 = vpop.f32.mrf.mxu0
    %1044 = vdwg.mxu0
    %v1045 = vtanh.pop %v1040
    %v1046 = vxor.u32 %v1040, 2147483648
    %v1047 = vmul.f32 %v1046, 1.442695
    %v1048 = vpow.pop %v1047
    %v1049 = vadd.f32 %v1048, 1.0
    %v1050 = vrcp.pop %v1049
    %v1051 = vmul.f32 1.0, %v1050
    %v1052 = vsel %vm72, %v1045, %v1051
    %v1053 = vmul.f32 %v1052, %v902
    %1055 = vrot.lane.b32.xlu0 %v1052, 64
    %v1056 = vpop.permute.xlu0 %1055
    %v1058 = vmul.f32 %v1052, %v1056
    %1060 = vrot.lane.b32.xlu0 %v1058, 32
    %v1061 = vpop.permute.xlu0 %1060
    %v1063 = vadd.f32 %v1053, %v1061
    %v1064 = vtanh.pop %v1063
    %1066 = vrot.lane.b32.xlu0 %v1064, 64
    %v1067 = vpop.permute.xlu0 %1066
    %v1069 = vmul.f32 %v1052, %v1067
    %1071 = vrot.lane.b32.xlu0 %v1069, 32
    %v1072 = vpop.permute.xlu0 %1071
    %s1074 = scalar_lea.vmem [#allocation11], 10
    %1075 = vst.msk [vmem:[%s1074] sm:$0x3] %vm269, %v1072
    %s1076 = scalar_lea.vmem [#allocation6], 6
    %v1077 = vld [vmem:[%s1076] sm:$0x1]
    %v1078 = vpack.c.bf16 %v990, %v990
    %1080 = vrot.lane.b32.xlu0 %v1078, 64
    %v1081 = vpop.permute.xlu0 %1080
    %v1084 = vsel %vm82, %v1077, %v1081
    %v1085 = vsel %vm110, %v1084, 0
    %1087 = vmatprep.subr.bf16.mxu0 0
    %1088 = vmatpush1.bf16.msra.mxu0 0
    %1089 = vmatprep.subr.bf16.mxu0 0
    %1090 = vmatpush1.bf16.msra.mxu0 0
    %1091 = vmatprep.subr.bf16.mxu0 0
    %1092 = vmatpush1.bf16.msra.mxu0 0
    %1093 = vmatprep.subr.bf16.mxu0 0
    %1094 = vmatpush1.bf16.msra.mxu0 0
    %1095 = vmatprep.subr.bf16.mxu0 0
    %1096 = vmatpush1.bf16.msra.mxu0 %v105
    %1097 = vmatprep.subr.bf16.mxu0 0
    %1098 = vmatpush1.bf16.msra.mxu0 %v104
    %1099 = vmatprep.subr.bf16.mxu0 0
    %1100 = vmatpush1.bf16.msra.mxu0 %v103
    %1101 = vmatprep.subr.bf16.mxu0 0
    %1102 = vmatpush1.bf16.msra.mxu0 %v102
    %1103 = vmatprep.subr.bf16.mxu0 0
    %1104 = vmatpush2.bf16.msra.mxu0 0
    %1105 = vmatprep.subr.bf16.mxu0 0
    %1106 = vmatpush2.bf16.msra.mxu0 0
    %1107 = vmatprep.subr.bf16.mxu0 0
    %1108 = vmatpush2.bf16.msra.mxu0 0
    %1109 = vmatprep.subr.bf16.mxu0 0
    %1110 = vmatpush2.bf16.msra.mxu0 0
    %1111 = vmatprep.subr.bf16.mxu0 0
    %1112 = vmatpush2.bf16.msra.mxu0 0
    %1113 = vmatprep.subr.bf16.mxu0 0
    %1114 = vmatpush2.bf16.msra.mxu0 0
    %1115 = vmatprep.subr.bf16.mxu0 0
    %1116 = vmatpush2.bf16.msra.mxu0 0
    %1117 = vmatprep.subr.bf16.mxu0 0
    %1118 = vmatpush2.bf16.msra.mxu0 0
    %1119 = vmatprep.mubr.bf16.mxu0 0
    %1120 = vmatmul.mubr.bf16.gmra.mxu0 %v1085
    %v1121 = vpop.f32.mrf.mxu0
    %v1122 = vadd.f32 %v66, %v1121
    %v1123 = vpop.f32.mrf.mxu0
    %v1124 = vpop.f32.mrf.mxu0
    %v1125 = vpop.f32.mrf.mxu0
    %1126 = vdwg.mxu0
    %v1127 = vtanh.pop %v1122
    %v1128 = vxor.u32 %v1122, 2147483648
    %v1129 = vmul.f32 %v1128, 1.442695
    %v1130 = vpow.pop %v1129
    %v1131 = vadd.f32 %v1130, 1.0
    %v1132 = vrcp.pop %v1131
    %v1133 = vmul.f32 1.0, %v1132
    %v1134 = vsel %vm72, %v1127, %v1133
    %v1135 = vmul.f32 %v1134, %v984
    %1137 = vrot.lane.b32.xlu0 %v1134, 64
    %v1138 = vpop.permute.xlu0 %1137
    %v1140 = vmul.f32 %v1134, %v1138
    %1142 = vrot.lane.b32.xlu0 %v1140, 32
    %v1143 = vpop.permute.xlu0 %1142
    %v1145 = vadd.f32 %v1135, %v1143
    %v1146 = vtanh.pop %v1145
    %1148 = vrot.lane.b32.xlu0 %v1146, 64
    %v1149 = vpop.permute.xlu0 %1148
    %v1151 = vmul.f32 %v1134, %v1149
    %v1152 = vtanh.pop %v1151
    %v1153 = vpack.c.bf16 %v1152, %v1152
    %v1154 = vpack.c.bf16 %v1069, %v1069
    %1156 = vrot.lane.b32.xlu0 %v1153, 32
    %v1157 = vpop.permute.xlu0 %1156
    %1159 = vrot.lane.b32.xlu0 %v1154, 64
    %v1160 = vpop.permute.xlu0 %1159
    %v1163 = vsel %vm82, %v1157, %v1160
    %v1164 = vsel %vm110, %v1163, 0
    %1166 = vmatprep.subr.bf16.mxu0 0
    %1167 = vmatpush1.bf16.msra.mxu0 0
    %1168 = vmatprep.subr.bf16.mxu0 0
    %1169 = vmatpush1.bf16.msra.mxu0 0
    %1170 = vmatprep.subr.bf16.mxu0 0
    %1171 = vmatpush1.bf16.msra.mxu0 0
    %1172 = vmatprep.subr.bf16.mxu0 0
    %1173 = vmatpush1.bf16.msra.mxu0 0
    %1174 = vmatprep.subr.bf16.mxu0 0
    %1175 = vmatpush1.bf16.msra.mxu0 %v105
    %1176 = vmatprep.subr.bf16.mxu0 0
    %1177 = vmatpush1.bf16.msra.mxu0 %v104
    %1178 = vmatprep.subr.bf16.mxu0 0
    %1179 = vmatpush1.bf16.msra.mxu0 %v103
    %1180 = vmatprep.subr.bf16.mxu0 0
    %1181 = vmatpush1.bf16.msra.mxu0 %v102
    %1182 = vmatprep.subr.bf16.mxu0 0
    %1183 = vmatpush2.bf16.msra.mxu0 0
    %1184 = vmatprep.subr.bf16.mxu0 0
    %1185 = vmatpush2.bf16.msra.mxu0 0
    %1186 = vmatprep.subr.bf16.mxu0 0
    %1187 = vmatpush2.bf16.msra.mxu0 0
    %1188 = vmatprep.subr.bf16.mxu0 0
    %1189 = vmatpush2.bf16.msra.mxu0 0
    %1190 = vmatprep.subr.bf16.mxu0 0
    %1191 = vmatpush2.bf16.msra.mxu0 0
    %1192 = vmatprep.subr.bf16.mxu0 0
    %1193 = vmatpush2.bf16.msra.mxu0 0
    %1194 = vmatprep.subr.bf16.mxu0 0
    %1195 = vmatpush2.bf16.msra.mxu0 0
    %1196 = vmatprep.subr.bf16.mxu0 0
    %1197 = vmatpush2.bf16.msra.mxu0 0
    %1198 = vmatprep.mubr.bf16.mxu0 0
    %1199 = vmatmul.mubr.bf16.gmra.mxu0 %v1164
    %v1200 = vpop.f32.mrf.mxu0
    %v1201 = vadd.f32 %v66, %v1200
    %v1202 = vpop.f32.mrf.mxu0
    %v1203 = vpop.f32.mrf.mxu0
    %v1204 = vpop.f32.mrf.mxu0
    %1205 = vdwg.mxu0
    %v1206 = vtanh.pop %v1201
    %v1207 = vxor.u32 %v1201, 2147483648
    %v1208 = vmul.f32 %v1207, 1.442695
    %v1209 = vpow.pop %v1208
    %v1210 = vadd.f32 %v1209, 1.0
    %v1211 = vrcp.pop %v1210
    %v1212 = vmul.f32 1.0, %v1211
    %v1213 = vsel %vm72, %v1206, %v1212
    %v1214 = vmul.f32 %v1213, %v1063
    %1216 = vrot.lane.b32.xlu0 %v1213, 64
    %v1217 = vpop.permute.xlu0 %1216
    %v1219 = vmul.f32 %v1213, %v1217
    %1221 = vrot.lane.b32.xlu0 %v1219, 32
    %v1222 = vpop.permute.xlu0 %1221
    %v1224 = vadd.f32 %v1214, %v1222
    %v1225 = vtanh.pop %v1224
    %1227 = vrot.lane.b32.xlu0 %v1225, 64
    %v1228 = vpop.permute.xlu0 %1227
    %v1230 = vmul.f32 %v1213, %v1228
    %1232 = vrot.lane.b32.xlu0 %v1230, 32
    %v1233 = vpop.permute.xlu0 %1232
    %s1235 = scalar_lea.vmem [#allocation11], 12
    %1236 = vst.msk [vmem:[%s1235] sm:$0x3] %vm269, %v1233
    %s1237 = scalar_lea.vmem [#allocation6], 7
    %v1238 = vld [vmem:[%s1237] sm:$0x1]
    %v1239 = vpack.c.bf16 %v1151, %v1151
    %1241 = vrot.lane.b32.xlu0 %v1239, 64
    %v1242 = vpop.permute.xlu0 %1241
    %v1245 = vsel %vm82, %v1238, %v1242
    %v1246 = vsel %vm110, %v1245, 0
    %1248 = vmatprep.subr.bf16.mxu0 0
    %1249 = vmatpush1.bf16.msra.mxu0 0
    %1250 = vmatprep.subr.bf16.mxu0 0
    %1251 = vmatpush1.bf16.msra.mxu0 0
    %1252 = vmatprep.subr.bf16.mxu0 0
    %1253 = vmatpush1.bf16.msra.mxu0 0
    %1254 = vmatprep.subr.bf16.mxu0 0
    %1255 = vmatpush1.bf16.msra.mxu0 0
    %1256 = vmatprep.subr.bf16.mxu0 0
    %1257 = vmatpush1.bf16.msra.mxu0 %v105
    %1258 = vmatprep.subr.bf16.mxu0 0
    %1259 = vmatpush1.bf16.msra.mxu0 %v104
    %1260 = vmatprep.subr.bf16.mxu0 0
    %1261 = vmatpush1.bf16.msra.mxu0 %v103
    %1262 = vmatprep.subr.bf16.mxu0 0
    %1263 = vmatpush1.bf16.msra.mxu0 %v102
    %1264 = vmatprep.subr.bf16.mxu0 0
    %1265 = vmatpush2.bf16.msra.mxu0 0
    %1266 = vmatprep.subr.bf16.mxu0 0
    %1267 = vmatpush2.bf16.msra.mxu0 0
    %1268 = vmatprep.subr.bf16.mxu0 0
    %1269 = vmatpush2.bf16.msra.mxu0 0
    %1270 = vmatprep.subr.bf16.mxu0 0
    %1271 = vmatpush2.bf16.msra.mxu0 0
    %1272 = vmatprep.subr.bf16.mxu0 0
    %1273 = vmatpush2.bf16.msra.mxu0 0
    %1274 = vmatprep.subr.bf16.mxu0 0
    %1275 = vmatpush2.bf16.msra.mxu0 0
    %1276 = vmatprep.subr.bf16.mxu0 0
    %1277 = vmatpush2.bf16.msra.mxu0 0
    %1278 = vmatprep.subr.bf16.mxu0 0
    %1279 = vmatpush2.bf16.msra.mxu0 0
    %1280 = vmatprep.mubr.bf16.mxu0 0
    %1281 = vmatmul.mubr.bf16.gmra.mxu0 %v1246
    %v1282 = vpop.f32.mrf.mxu0
    %v1283 = vadd.f32 %v66, %v1282
    %v1284 = vpop.f32.mrf.mxu0
    %v1285 = vpop.f32.mrf.mxu0
    %v1286 = vpop.f32.mrf.mxu0
    %1287 = vdwg.mxu0
    %v1288 = vtanh.pop %v1283
    %v1289 = vxor.u32 %v1283, 2147483648
    %v1290 = vmul.f32 %v1289, 1.442695
    %v1291 = vpow.pop %v1290
    %v1292 = vadd.f32 %v1291, 1.0
    %v1293 = vrcp.pop %v1292
    %v1294 = vmul.f32 1.0, %v1293
    %v1295 = vsel %vm72, %v1288, %v1294
    %v1296 = vmul.f32 %v1295, %v1145
    %1298 = vrot.lane.b32.xlu0 %v1295, 64
    %v1299 = vpop.permute.xlu0 %1298
    %v1301 = vmul.f32 %v1295, %v1299
    %1303 = vrot.lane.b32.xlu0 %v1301, 32
    %v1304 = vpop.permute.xlu0 %1303
    %v1306 = vadd.f32 %v1296, %v1304
    %v1307 = vtanh.pop %v1306
    %1309 = vrot.lane.b32.xlu0 %v1307, 64
    %v1310 = vpop.permute.xlu0 %1309
    %v1312 = vmul.f32 %v1295, %v1310
    %v1313 = vtanh.pop %v1312
    %v1314 = vpack.c.bf16 %v1313, %v1313
    %v1315 = vpack.c.bf16 %v1230, %v1230
    %1317 = vrot.lane.b32.xlu0 %v1314, 32
    %v1318 = vpop.permute.xlu0 %1317
    %1320 = vrot.lane.b32.xlu0 %v1315, 64
    %v1321 = vpop.permute.xlu0 %1320
    %v1324 = vsel %vm82, %v1318, %v1321
    %v1325 = vsel %vm110, %v1324, 0
    %1327 = vmatprep.subr.bf16.mxu0 0
    %1328 = vmatpush1.bf16.msra.mxu0 0
    %1329 = vmatprep.subr.bf16.mxu0 0
    %1330 = vmatpush1.bf16.msra.mxu0 0
    %1331 = vmatprep.subr.bf16.mxu0 0
    %1332 = vmatpush1.bf16.msra.mxu0 0
    %1333 = vmatprep.subr.bf16.mxu0 0
    %1334 = vmatpush1.bf16.msra.mxu0 0
    %1335 = vmatprep.subr.bf16.mxu0 0
    %1336 = vmatpush1.bf16.msra.mxu0 %v105
    %1337 = vmatprep.subr.bf16.mxu0 0
    %1338 = vmatpush1.bf16.msra.mxu0 %v104
    %1339 = vmatprep.subr.bf16.mxu0 0
    %1340 = vmatpush1.bf16.msra.mxu0 %v103
    %1341 = vmatprep.subr.bf16.mxu0 0
    %1342 = vmatpush1.bf16.msra.mxu0 %v102
    %1343 = vmatprep.subr.bf16.mxu0 0
    %1344 = vmatpush2.bf16.msra.mxu0 0
    %1345 = vmatprep.subr.bf16.mxu0 0
    %1346 = vmatpush2.bf16.msra.mxu0 0
    %1347 = vmatprep.subr.bf16.mxu0 0
    %1348 = vmatpush2.bf16.msra.mxu0 0
    %1349 = vmatprep.subr.bf16.mxu0 0
    %1350 = vmatpush2.bf16.msra.mxu0 0
    %1351 = vmatprep.subr.bf16.mxu0 0
    %1352 = vmatpush2.bf16.msra.mxu0 0
    %1353 = vmatprep.subr.bf16.mxu0 0
    %1354 = vmatpush2.bf16.msra.mxu0 0
    %1355 = vmatprep.subr.bf16.mxu0 0
    %1356 = vmatpush2.bf16.msra.mxu0 0
    %1357 = vmatprep.subr.bf16.mxu0 0
    %1358 = vmatpush2.bf16.msra.mxu0 0
    %1359 = vmatprep.mubr.bf16.mxu0 0
    %1360 = vmatmul.mubr.bf16.gmra.mxu0 %v1325
    %v1361 = vpop.f32.mrf.mxu0
    %v1362 = vadd.f32 %v66, %v1361
    %v1363 = vpop.f32.mrf.mxu0
    %v1364 = vpop.f32.mrf.mxu0
    %v1365 = vpop.f32.mrf.mxu0
    %1366 = vdwg.mxu0
    %v1367 = vtanh.pop %v1362
    %v1368 = vxor.u32 %v1362, 2147483648
    %v1369 = vmul.f32 %v1368, 1.442695
    %v1370 = vpow.pop %v1369
    %v1371 = vadd.f32 %v1370, 1.0
    %v1372 = vrcp.pop %v1371
    %v1373 = vmul.f32 1.0, %v1372
    %v1374 = vsel %vm72, %v1367, %v1373
    %v1375 = vmul.f32 %v1374, %v1224
    %1377 = vrot.lane.b32.xlu0 %v1374, 64
    %v1378 = vpop.permute.xlu0 %1377
    %v1380 = vmul.f32 %v1374, %v1378
    %1382 = vrot.lane.b32.xlu0 %v1380, 32
    %v1383 = vpop.permute.xlu0 %1382
    %v1385 = vadd.f32 %v1375, %v1383
    %v1386 = vtanh.pop %v1385
    %1388 = vrot.lane.b32.xlu0 %v1386, 64
    %v1389 = vpop.permute.xlu0 %1388
    %v1391 = vmul.f32 %v1374, %v1389
    %1393 = vrot.lane.b32.xlu0 %v1391, 32
    %v1394 = vpop.permute.xlu0 %1393
    %s1396 = scalar_lea.vmem [#allocation11], 14
    %1397 = vst.msk [vmem:[%s1396] sm:$0x3] %vm269, %v1394
    %1399 = vrot.lane.b32.xlu0 %v1312, 32
    %v1400 = vpop.permute.xlu0 %1399
    %1402 = vst.msk [vmem:[#allocation2] sm:$0x3] %vm269, %v1400
    %1404 = vrot.lane.b32.xlu0 %v1306, 96
    %v1405 = vpop.permute.xlu0 %1404
    %1407 = vst.msk [vmem:[#allocation3] sm:$0x3] %vm269, %v1405
    %1408 = vst.msk [vmem:[#allocation4] sm:$0x3] %vm269, %v1394
    %1410 = vrot.lane.b32.xlu0 %v1385, 96
    %v1411 = vpop.permute.xlu0 %1410
    %1413 = vst.msk [vmem:[#allocation5] sm:$0x3] %vm269, %v1411
    // Predicated region
    $region26: #{tpu_custom_call.1} parent=1 // pred_check
      _
    $region27: #{tpu_custom_call.1} parent=1 // pred_check_branch
      %1415 = sbr.rel (0) target = $region29
    $region28: #{tpu_custom_call.1} parent=1 // pred_region
      %s1417 = ssub.s32 256, 256
      %1418 = vsyncadd [#allocation8], %s1417
      %s1419 = sshll.u32 [#allocation11], 4
      %s1420 = int_to_ptr.vmem [resolvable:$true] %s1419
      %1425 = dma.vmem_to_hbm [thread:$0]  %s1420, 256, %s3, [#allocation8], 32, 32, 2
    $region29: #{tpu_custom_call.1} parent=1 // pred_fallthru
      _
    // Predicated region
    $region30: #{tpu_custom_call.1} parent=1 // pred_check
      _
    $region31: #{tpu_custom_call.1} parent=1 // pred_check_branch
      %1427 = sbr.rel (0) target = $region33
    $region32: #{tpu_custom_call.1} parent=1 // pred_region
      %1428 = dma.done [#allocation8], 256
    $region33: #{tpu_custom_call.1} parent=1 // pred_fallthru
      _
    %1429 = vsyncpa [#allocation7], 1
    %1430 = vsyncpa [#allocation10], 1
    %1431 = vsyncpa [#allocation8], 1

</llo_original>
